<compile_context>
chip_gen: v7x
topology: tpu7x:2x2x1
jax: 0.10.0
libtpu: 0.0.40
codegen_flags: <defaults>
</compile_context>

<pallas_src>
import jax
import jax.numpy as jnp
from jax.experimental import pallas as pl
from jax.experimental.pallas import tpu as pltpu

_LANE = 128          # TPU lane width (last-dim vreg width)
_SUBLANE_BF16 = 16   # bf16 sublane packing (second-to-last dim granularity)


def _round_up(x, m):
    return (x + m - 1) // m * m


def _mlp_kernel(x_ref,
                w1_ref, b1_ref,
                w2_ref, b2_ref,
                w3_ref, b3_ref,
                w4_ref, b4_ref,
                w5_ref, b5_ref,
                w6_ref, b6_ref,
                o_ref):
    """Fused 6-layer MLP: 5 x (matmul + bias + ReLU) followed by matmul + bias.

    Matmuls are bf16 on the MXU with f32 accumulation; bias-add / ReLU run in
    f32 (v5e VPU has no bf16); activations are cast back to bf16 right after
    the ReLU to halve live VMEM/vreg pressure between layers.
    """

    def dense(h_bf16, w_ref, b_ref, *, relu):
        y = jnp.dot(h_bf16, w_ref[...], preferred_element_type=jnp.float32)
        y = y + b_ref[...]                     # f32 bias add
        if relu:
            return jnp.maximum(y, 0.0).astype(jnp.bfloat16)
        return y                               # f32 (final layer)

    h = x_ref[...]                             # bf16 input tile
    h = dense(h, w1_ref, b1_ref, relu=True)
    h = dense(h, w2_ref, b2_ref, relu=True)
    h = dense(h, w3_ref, b3_ref, relu=True)
    h = dense(h, w4_ref, b4_ref, relu=True)
    h = dense(h, w5_ref, b5_ref, relu=True)
    out = dense(h, w6_ref, b6_ref, relu=False)
    o_ref[...] = out.astype(o_ref.dtype)       # bf16 store (lane-dense)


def prepare_params(params, in_features):
    """One-time (hoisted) padding + bf16 cast of the six (W, b) pairs.

    params: list of 6 (W, b), W: (in_dim, out_dim) f32 (already transposed vs
    PyTorch so y = x @ W + b), b: (1, out_dim) f32.
    Returns (flat_padded_params, padded_dims).
    """
    dims = [in_features] + [w.shape[1] for w, _ in params]
    pdims = [_round_up(d, _LANE) for d in dims]
    flat = []
    for li, (w, b) in enumerate(params):
        wp = jnp.pad(w.astype(jnp.bfloat16),
                     ((0, pdims[li] - w.shape[0]),
                      (0, pdims[li + 1] - w.shape[1])))
        bp = jnp.pad(b.astype(jnp.float32),
                     ((0, 0), (0, pdims[li + 1] - b.shape[1])))
        flat += [wp, bp]
    return tuple(flat), tuple(pdims)


def _vmem_budget_bytes():
    """Per-generation VMEM budget (leave headroom below physical capacity)."""
    try:
        vmem = int(pltpu.get_tpu_info().vmem_capacity_bytes)
    except Exception:
        vmem = 64 << 20
    if vmem <= (64 << 20):        # v7x-class: 64 MiB physical -> leave headroom
        return 52 << 20
    return 100 << 20              # v5e / v6e: 128 MiB physical


def mlp_forward(x, flat_params, pdims, out_features, *, batch_tile=512):
    """Run the fused MLP Pallas kernel.

    x:           (B, in_features) float32
    flat_params: output of prepare_params (padded bf16 weights / f32 biases)
    pdims:       padded feature dims (len 7)
    Returns (B, out_features) float32.
    """
    B, in_features = x.shape
    budget = _vmem_budget_bytes()
    param_bytes = sum(int(p.size) * p.dtype.itemsize for p in flat_params)

    # --- adaptive batch tile (multiple of 16 for bf16 sublane packing) --------
    tb = max(_SUBLANE_BF16, min(int(batch_tile), _round_up(B, _SUBLANE_BF16)))
    tb = _round_up(tb, _SUBLANE_BF16)
    # Megacore: if a single grid step would result but the batch can split,
    # halve the tile so the "parallel" axis has >= 2 steps.
    while tb > _SUBLANE_BF16 and _round_up(B, tb) // tb < 2 and B > tb // 2:
        tb = _round_up(tb // 2, _SUBLANE_BF16)

    def vmem_estimate(tb_, param_buf_count):
        x_blk = tb_ * pdims[0] * 2              # bf16 input tile
        o_blk = tb_ * pdims[-1] * 2             # bf16 output tile
        act = 2 * tb_ * max(pdims) * 4          # live f32 accumulator headroom
        return 2 * (x_blk + o_blk) + param_buf_count * param_bytes + act + (4 << 20)

    # Shrink the tile rather than requesting more than the budget.
    while tb > _SUBLANE_BF16 and vmem_estimate(tb, 1) > budget:
        tb = _round_up(tb // 2, _SUBLANE_BF16)

    Bp = _round_up(max(B, 1), tb)
    grid = (Bp // tb,)

    # Input padding (cheap jnp.pad; zero padding is exact through matmul/bias/ReLU).
    x_p = jnp.pad(x.astype(jnp.bfloat16),
                  ((0, Bp - B), (0, pdims[0] - in_features)))

    x_spec = pl.BlockSpec((tb, pdims[0]), lambda i: (i, 0))
    out_spec = pl.BlockSpec((tb, pdims[-1]), lambda i: (i, 0))

    flops = 2 * Bp * sum(pdims[i] * pdims[i + 1] for i in range(6))
    bytes_accessed = Bp * pdims[0] * 2 + param_bytes + Bp * pdims[-1] * 2
    cost = pl.CostEstimate(flops=int(flops), transcendentals=0,
                           bytes_accessed=int(bytes_accessed))

    def run(single_buffer_params):
        if single_buffer_params:
            # Constant index_map -> weights never change across grid steps;
            # single-buffer them to halve the resident parameter footprint.
            param_specs = [pl.BlockSpec(p.shape, lambda i: (0, 0),
                                        pipeline_mode=pl.Buffered(1))
                           for p in flat_params]
            nbuf = 1
        else:
            param_specs = [pl.BlockSpec(p.shape, lambda i: (0, 0))
                           for p in flat_params]
            nbuf = 2
        vmem_limit = int(max(16 << 20, min(vmem_estimate(tb, nbuf), budget)))
        return pl.pallas_call(
            _mlp_kernel,
            out_shape=jax.ShapeDtypeStruct((Bp, pdims[-1]), jnp.bfloat16),
            grid_spec=pltpu.PrefetchScalarGridSpec(
                num_scalar_prefetch=0,
                grid=grid,
                in_specs=[x_spec] + param_specs,
                out_specs=out_spec,
            ),
            compiler_params=pltpu.CompilerParams(
                dimension_semantics=("parallel",),
                vmem_limit_bytes=vmem_limit,
            ),
            cost_estimate=cost,
        )(x_p, *flat_params)

    try:
        out_p = run(single_buffer_params=True)
    except Exception:
        # Fallback if this JAX build rejects single-buffered pipeline_mode.
        out_p = run(single_buffer_params=False)

    # Slice away batch padding and the lane padding of the output; back to f32.
    return out_p[:B, :out_features].astype(jnp.float32)


def init_params(key, in_features, hidden_dim_factor, out_features):
    """Deterministic synthetic init matching the PyTorch module's layer shapes."""
    h = hidden_dim_factor
    dims = [in_features, 4 * h, 8 * h, 4 * h, 2 * h, h, out_features]
    params = []
    for i in range(6):
        key, wk, bk = jax.random.split(key, 3)
        bound = 1.0 / (dims[i] ** 0.5)
        # Stored as (in_dim, out_dim) so the kernel does x @ W (== x @ W_pt.T).
        w = jax.random.uniform(wk, (dims[i], dims[i + 1]),
                               minval=-bound, maxval=bound, dtype=jnp.float32)
        b = jax.random.uniform(bk, (1, dims[i + 1]),
                               minval=-bound, maxval=bound, dtype=jnp.float32)
        params.append((w, b))
    return params


def mlp_reference(x, params):
    """Pure-JAX reference with the kernel's precision discipline
    (bf16 operands, f32 accumulation, f32 bias/ReLU, bf16 between layers)."""
    h = x.astype(jnp.bfloat16)
    n = len(params)
    for i, (w, b) in enumerate(params):
        y = jnp.dot(h, w.astype(jnp.bfloat16),
                    preferred_element_type=jnp.float32) + b.astype(jnp.float32)
        h = jnp.maximum(y, 0.0).astype(jnp.bfloat16) if i < n - 1 else y
    return h


if __name__ == "__main__":
    in_features = 32
    hidden_dim_factor = 16
    out_features = 8
    batch = 8

    key = jax.random.PRNGKey(0)
    key, xk = jax.random.split(key)
    x = jax.random.normal(xk, (batch, in_features), dtype=jnp.float32)

    params = init_params(key, in_features, hidden_dim_factor, out_features)
    flat_params, pdims = prepare_params(params, in_features)   # one-time prep

    out = jax.block_until_ready(mlp_forward(x, flat_params, pdims, out_features))

    ref = mlp_reference(x, params)
    # Kernel stores its output in bf16; round the reference the same way.
    ref = ref.astype(jnp.bfloat16).astype(jnp.float32)

    assert out.shape == (batch, out_features)
    assert jnp.allclose(out, ref, atol=1e-2, rtol=1e-2), "mismatch vs reference"

    print("KERNEL_OK")
</pallas_src>

<mosaic_0001>
module attributes {stable_mosaic.version = 11 : i64} {
  func.func @_mlp_kernel(%arg0: i32, %arg1: memref<16x128xbf16, #tpu.memory_space<vmem>>, %arg2: memref<128x128xbf16, #tpu.memory_space<vmem>>, %arg3: memref<1x128xf32, #tpu.memory_space<vmem>>, %arg4: memref<128x128xbf16, #tpu.memory_space<vmem>>, %arg5: memref<1x128xf32, #tpu.memory_space<vmem>>, %arg6: memref<128x128xbf16, #tpu.memory_space<vmem>>, %arg7: memref<1x128xf32, #tpu.memory_space<vmem>>, %arg8: memref<128x128xbf16, #tpu.memory_space<vmem>>, %arg9: memref<1x128xf32, #tpu.memory_space<vmem>>, %arg10: memref<128x128xbf16, #tpu.memory_space<vmem>>, %arg11: memref<1x128xf32, #tpu.memory_space<vmem>>, %arg12: memref<128x128xbf16, #tpu.memory_space<vmem>>, %arg13: memref<1x128xf32, #tpu.memory_space<vmem>>, %arg14: memref<16x128xbf16, #tpu.memory_space<vmem>>) attributes {dimension_semantics = [#tpu.dimension_semantics<parallel>], iteration_bounds = array<i64: 1>, scalar_prefetch = 0 : i64, scratch_operands = 0 : i64, tpu.core_type = #tpu.core_type<tc>, window_params = [{transform_indices = @transform_0, window_bounds = array<i64: 16, 128>}, {pipeline_mode = #tpu.pipeline_mode<synchronous>, transform_indices = @transform_1, window_bounds = array<i64: 128, 128>}, {pipeline_mode = #tpu.pipeline_mode<synchronous>, transform_indices = @transform_2, window_bounds = array<i64: 1, 128>}, {pipeline_mode = #tpu.pipeline_mode<synchronous>, transform_indices = @transform_3, window_bounds = array<i64: 128, 128>}, {pipeline_mode = #tpu.pipeline_mode<synchronous>, transform_indices = @transform_4, window_bounds = array<i64: 1, 128>}, {pipeline_mode = #tpu.pipeline_mode<synchronous>, transform_indices = @transform_5, window_bounds = array<i64: 128, 128>}, {pipeline_mode = #tpu.pipeline_mode<synchronous>, transform_indices = @transform_6, window_bounds = array<i64: 1, 128>}, {pipeline_mode = #tpu.pipeline_mode<synchronous>, transform_indices = @transform_7, window_bounds = array<i64: 128, 128>}, {pipeline_mode = #tpu.pipeline_mode<synchronous>, transform_indices = @transform_8, window_bounds = array<i64: 1, 128>}, {pipeline_mode = #tpu.pipeline_mode<synchronous>, transform_indices = @transform_9, window_bounds = array<i64: 128, 128>}, {pipeline_mode = #tpu.pipeline_mode<synchronous>, transform_indices = @transform_10, window_bounds = array<i64: 1, 128>}, {pipeline_mode = #tpu.pipeline_mode<synchronous>, transform_indices = @transform_11, window_bounds = array<i64: 128, 128>}, {pipeline_mode = #tpu.pipeline_mode<synchronous>, transform_indices = @transform_12, window_bounds = array<i64: 1, 128>}, {transform_indices = @transform_13, window_bounds = array<i64: 16, 128>}]} {
    %c0 = arith.constant 0 : index
    %c0_0 = arith.constant 0 : index
    %0 = vector.load %arg1[%c0, %c0_0] : memref<16x128xbf16, #tpu.memory_space<vmem>>, vector<16x128xbf16>
    %c0_1 = arith.constant 0 : index
    %c0_2 = arith.constant 0 : index
    %1 = vector.load %arg2[%c0_1, %c0_2] : memref<128x128xbf16, #tpu.memory_space<vmem>>, vector<128x128xbf16>
    %cst = arith.constant dense<0.000000e+00> : vector<16x128xf32>
    %2 = tpu.matmul %0, %1, %cst {dimension_numbers = #tpu.dot_dimension_numbers<[1], [0], [0], [1], [0, 0, 1, 1], [], []>} : vector<16x128xbf16>, vector<128x128xbf16>, vector<16x128xf32> -> vector<16x128xf32>
    %c0_3 = arith.constant 0 : index
    %c0_4 = arith.constant 0 : index
    %3 = vector.load %arg3[%c0_3, %c0_4] : memref<1x128xf32, #tpu.memory_space<vmem>>, vector<1x128xf32>
    %4 = vector.broadcast %3 : vector<1x128xf32> to vector<16x128xf32>
    %5 = arith.addf %2, %4 : vector<16x128xf32>
    %cst_5 = arith.constant 0.000000e+00 : f32
    %6 = vector.broadcast %cst_5 : f32 to vector<16x128xf32>
    %7 = arith.maximumf %5, %6 : vector<16x128xf32>
    %8 = arith.truncf %7 : vector<16x128xf32> to vector<16x128xbf16>
    %c0_6 = arith.constant 0 : index
    %c0_7 = arith.constant 0 : index
    %9 = vector.load %arg4[%c0_6, %c0_7] : memref<128x128xbf16, #tpu.memory_space<vmem>>, vector<128x128xbf16>
    %cst_8 = arith.constant dense<0.000000e+00> : vector<16x128xf32>
    %10 = tpu.matmul %8, %9, %cst_8 {dimension_numbers = #tpu.dot_dimension_numbers<[1], [0], [0], [1], [0, 0, 1, 1], [], []>} : vector<16x128xbf16>, vector<128x128xbf16>, vector<16x128xf32> -> vector<16x128xf32>
    %c0_9 = arith.constant 0 : index
    %c0_10 = arith.constant 0 : index
    %11 = vector.load %arg5[%c0_9, %c0_10] : memref<1x128xf32, #tpu.memory_space<vmem>>, vector<1x128xf32>
    %12 = vector.broadcast %11 : vector<1x128xf32> to vector<16x128xf32>
    %13 = arith.addf %10, %12 : vector<16x128xf32>
    %cst_11 = arith.constant 0.000000e+00 : f32
    %14 = vector.broadcast %cst_11 : f32 to vector<16x128xf32>
    %15 = arith.maximumf %13, %14 : vector<16x128xf32>
    %16 = arith.truncf %15 : vector<16x128xf32> to vector<16x128xbf16>
    %c0_12 = arith.constant 0 : index
    %c0_13 = arith.constant 0 : index
    %17 = vector.load %arg6[%c0_12, %c0_13] : memref<128x128xbf16, #tpu.memory_space<vmem>>, vector<128x128xbf16>
    %cst_14 = arith.constant dense<0.000000e+00> : vector<16x128xf32>
    %18 = tpu.matmul %16, %17, %cst_14 {dimension_numbers = #tpu.dot_dimension_numbers<[1], [0], [0], [1], [0, 0, 1, 1], [], []>} : vector<16x128xbf16>, vector<128x128xbf16>, vector<16x128xf32> -> vector<16x128xf32>
    %c0_15 = arith.constant 0 : index
    %c0_16 = arith.constant 0 : index
    %19 = vector.load %arg7[%c0_15, %c0_16] : memref<1x128xf32, #tpu.memory_space<vmem>>, vector<1x128xf32>
    %20 = vector.broadcast %19 : vector<1x128xf32> to vector<16x128xf32>
    %21 = arith.addf %18, %20 : vector<16x128xf32>
    %cst_17 = arith.constant 0.000000e+00 : f32
    %22 = vector.broadcast %cst_17 : f32 to vector<16x128xf32>
    %23 = arith.maximumf %21, %22 : vector<16x128xf32>
    %24 = arith.truncf %23 : vector<16x128xf32> to vector<16x128xbf16>
    %c0_18 = arith.constant 0 : index
    %c0_19 = arith.constant 0 : index
    %25 = vector.load %arg8[%c0_18, %c0_19] : memref<128x128xbf16, #tpu.memory_space<vmem>>, vector<128x128xbf16>
    %cst_20 = arith.constant dense<0.000000e+00> : vector<16x128xf32>
    %26 = tpu.matmul %24, %25, %cst_20 {dimension_numbers = #tpu.dot_dimension_numbers<[1], [0], [0], [1], [0, 0, 1, 1], [], []>} : vector<16x128xbf16>, vector<128x128xbf16>, vector<16x128xf32> -> vector<16x128xf32>
    %c0_21 = arith.constant 0 : index
    %c0_22 = arith.constant 0 : index
    %27 = vector.load %arg9[%c0_21, %c0_22] : memref<1x128xf32, #tpu.memory_space<vmem>>, vector<1x128xf32>
    %28 = vector.broadcast %27 : vector<1x128xf32> to vector<16x128xf32>
    %29 = arith.addf %26, %28 : vector<16x128xf32>
    %cst_23 = arith.constant 0.000000e+00 : f32
    %30 = vector.broadcast %cst_23 : f32 to vector<16x128xf32>
    %31 = arith.maximumf %29, %30 : vector<16x128xf32>
    %32 = arith.truncf %31 : vector<16x128xf32> to vector<16x128xbf16>
    %c0_24 = arith.constant 0 : index
    %c0_25 = arith.constant 0 : index
    %33 = vector.load %arg10[%c0_24, %c0_25] : memref<128x128xbf16, #tpu.memory_space<vmem>>, vector<128x128xbf16>
    %cst_26 = arith.constant dense<0.000000e+00> : vector<16x128xf32>
    %34 = tpu.matmul %32, %33, %cst_26 {dimension_numbers = #tpu.dot_dimension_numbers<[1], [0], [0], [1], [0, 0, 1, 1], [], []>} : vector<16x128xbf16>, vector<128x128xbf16>, vector<16x128xf32> -> vector<16x128xf32>
    %c0_27 = arith.constant 0 : index
    %c0_28 = arith.constant 0 : index
    %35 = vector.load %arg11[%c0_27, %c0_28] : memref<1x128xf32, #tpu.memory_space<vmem>>, vector<1x128xf32>
    %36 = vector.broadcast %35 : vector<1x128xf32> to vector<16x128xf32>
    %37 = arith.addf %34, %36 : vector<16x128xf32>
    %cst_29 = arith.constant 0.000000e+00 : f32
    %38 = vector.broadcast %cst_29 : f32 to vector<16x128xf32>
    %39 = arith.maximumf %37, %38 : vector<16x128xf32>
    %40 = arith.truncf %39 : vector<16x128xf32> to vector<16x128xbf16>
    %c0_30 = arith.constant 0 : index
    %c0_31 = arith.constant 0 : index
    %41 = vector.load %arg12[%c0_30, %c0_31] : memref<128x128xbf16, #tpu.memory_space<vmem>>, vector<128x128xbf16>
    %cst_32 = arith.constant dense<0.000000e+00> : vector<16x128xf32>
    %42 = tpu.matmul %40, %41, %cst_32 {dimension_numbers = #tpu.dot_dimension_numbers<[1], [0], [0], [1], [0, 0, 1, 1], [], []>} : vector<16x128xbf16>, vector<128x128xbf16>, vector<16x128xf32> -> vector<16x128xf32>
    %c0_33 = arith.constant 0 : index
    %c0_34 = arith.constant 0 : index
    %43 = vector.load %arg13[%c0_33, %c0_34] : memref<1x128xf32, #tpu.memory_space<vmem>>, vector<1x128xf32>
    %44 = vector.broadcast %43 : vector<1x128xf32> to vector<16x128xf32>
    %45 = arith.addf %42, %44 : vector<16x128xf32>
    %46 = arith.truncf %45 : vector<16x128xf32> to vector<16x128xbf16>
    %c0_35 = arith.constant 0 : index
    %c0_36 = arith.constant 0 : index
    %47 = vector.load %arg14[%c0_35, %c0_36] : memref<16x128xbf16, #tpu.memory_space<vmem>>, vector<16x128xbf16>
    tpu.vector_store %arg14[%c0_35, %c0_36], %46 {strides = array<i32>} : memref<16x128xbf16, #tpu.memory_space<vmem>>, vector<16x128xbf16>,
    return
  }
  func.func @transform_0(%arg0: i32) -> (i32, i32) {
    %c0_i32 = arith.constant 0 : i32
    %c0_i32_0 = arith.constant 0 : i32
    return %arg0, %c0_i32 : i32, i32
  }
  func.func @transform_1(%arg0: i32) -> (i32, i32) {
    %c0_i32 = arith.constant 0 : i32
    %c0_i32_0 = arith.constant 0 : i32
    %c0_i32_1 = arith.constant 0 : i32
    return %c0_i32, %c0_i32_0 : i32, i32
  }
  func.func @transform_2(%arg0: i32) -> (i32, i32) {
    %c0_i32 = arith.constant 0 : i32
    %c0_i32_0 = arith.constant 0 : i32
    %c0_i32_1 = arith.constant 0 : i32
    return %c0_i32, %c0_i32_0 : i32, i32
  }
  func.func @transform_3(%arg0: i32) -> (i32, i32) {
    %c0_i32 = arith.constant 0 : i32
    %c0_i32_0 = arith.constant 0 : i32
    %c0_i32_1 = arith.constant 0 : i32
    return %c0_i32, %c0_i32_0 : i32, i32
  }
  func.func @transform_4(%arg0: i32) -> (i32, i32) {
    %c0_i32 = arith.constant 0 : i32
    %c0_i32_0 = arith.constant 0 : i32
    %c0_i32_1 = arith.constant 0 : i32
    return %c0_i32, %c0_i32_0 : i32, i32
  }
  func.func @transform_5(%arg0: i32) -> (i32, i32) {
    %c0_i32 = arith.constant 0 : i32
    %c0_i32_0 = arith.constant 0 : i32
    %c0_i32_1 = arith.constant 0 : i32
    return %c0_i32, %c0_i32_0 : i32, i32
  }
  func.func @transform_6(%arg0: i32) -> (i32, i32) {
    %c0_i32 = arith.constant 0 : i32
    %c0_i32_0 = arith.constant 0 : i32
    %c0_i32_1 = arith.constant 0 : i32
    return %c0_i32, %c0_i32_0 : i32, i32
  }
  func.func @transform_7(%arg0: i32) -> (i32, i32) {
    %c0_i32 = arith.constant 0 : i32
    %c0_i32_0 = arith.constant 0 : i32
    %c0_i32_1 = arith.constant 0 : i32
    return %c0_i32, %c0_i32_0 : i32, i32
  }
  func.func @transform_8(%arg0: i32) -> (i32, i32) {
    %c0_i32 = arith.constant 0 : i32
    %c0_i32_0 = arith.constant 0 : i32
    %c0_i32_1 = arith.constant 0 : i32
    return %c0_i32, %c0_i32_0 : i32, i32
  }
  func.func @transform_9(%arg0: i32) -> (i32, i32) {
    %c0_i32 = arith.constant 0 : i32
    %c0_i32_0 = arith.constant 0 : i32
    %c0_i32_1 = arith.constant 0 : i32
    return %c0_i32, %c0_i32_0 : i32, i32
  }
  func.func @transform_10(%arg0: i32) -> (i32, i32) {
    %c0_i32 = arith.constant 0 : i32
    %c0_i32_0 = arith.constant 0 : i32
    %c0_i32_1 = arith.constant 0 : i32
    return %c0_i32, %c0_i32_0 : i32, i32
  }
  func.func @transform_11(%arg0: i32) -> (i32, i32) {
    %c0_i32 = arith.constant 0 : i32
    %c0_i32_0 = arith.constant 0 : i32
    %c0_i32_1 = arith.constant 0 : i32
    return %c0_i32, %c0_i32_0 : i32, i32
  }
  func.func @transform_12(%arg0: i32) -> (i32, i32) {
    %c0_i32 = arith.constant 0 : i32
    %c0_i32_0 = arith.constant 0 : i32
    %c0_i32_1 = arith.constant 0 : i32
    return %c0_i32, %c0_i32_0 : i32, i32
  }
  func.func @transform_13(%arg0: i32) -> (i32, i32) {
    %c0_i32 = arith.constant 0 : i32
    %c0_i32_0 = arith.constant 0 : i32
    return %arg0, %c0_i32 : i32, i32
  }
}

module attributes {stable_mosaic.version = 11 : i64} {
  func.func @_mlp_kernel(%arg0: i32, %arg1: memref<16x128xbf16, #tpu.memory_space<vmem>>, %arg2: memref<128x128xbf16, #tpu.memory_space<vmem>>, %arg3: memref<1x128xf32, #tpu.memory_space<vmem>>, %arg4: memref<128x128xbf16, #tpu.memory_space<vmem>>, %arg5: memref<1x128xf32, #tpu.memory_space<vmem>>, %arg6: memref<128x128xbf16, #tpu.memory_space<vmem>>, %arg7: memref<1x128xf32, #tpu.memory_space<vmem>>, %arg8: memref<128x128xbf16, #tpu.memory_space<vmem>>, %arg9: memref<1x128xf32, #tpu.memory_space<vmem>>, %arg10: memref<128x128xbf16, #tpu.memory_space<vmem>>, %arg11: memref<1x128xf32, #tpu.memory_space<vmem>>, %arg12: memref<128x128xbf16, #tpu.memory_space<vmem>>, %arg13: memref<1x128xf32, #tpu.memory_space<vmem>>, %arg14: memref<16x128xbf16, #tpu.memory_space<vmem>>) attributes {dimension_semantics = [#tpu.dimension_semantics<parallel>], iteration_bounds = array<i64: 1>, scalar_prefetch = 0 : i64, scratch_operands = 0 : i64, tpu.core_type = #tpu.core_type<tc>, window_params = [{transform_indices = @transform_0, window_bounds = array<i64: 16, 128>}, {pipeline_mode = #tpu.pipeline_mode<synchronous>, transform_indices = @transform_1, window_bounds = array<i64: 128, 128>}, {pipeline_mode = #tpu.pipeline_mode<synchronous>, transform_indices = @transform_2, window_bounds = array<i64: 1, 128>}, {pipeline_mode = #tpu.pipeline_mode<synchronous>, transform_indices = @transform_3, window_bounds = array<i64: 128, 128>}, {pipeline_mode = #tpu.pipeline_mode<synchronous>, transform_indices = @transform_4, window_bounds = array<i64: 1, 128>}, {pipeline_mode = #tpu.pipeline_mode<synchronous>, transform_indices = @transform_5, window_bounds = array<i64: 128, 128>}, {pipeline_mode = #tpu.pipeline_mode<synchronous>, transform_indices = @transform_6, window_bounds = array<i64: 1, 128>}, {pipeline_mode = #tpu.pipeline_mode<synchronous>, transform_indices = @transform_7, window_bounds = array<i64: 128, 128>}, {pipeline_mode = #tpu.pipeline_mode<synchronous>, transform_indices = @transform_8, window_bounds = array<i64: 1, 128>}, {pipeline_mode = #tpu.pipeline_mode<synchronous>, transform_indices = @transform_9, window_bounds = array<i64: 128, 128>}, {pipeline_mode = #tpu.pipeline_mode<synchronous>, transform_indices = @transform_10, window_bounds = array<i64: 1, 128>}, {pipeline_mode = #tpu.pipeline_mode<synchronous>, transform_indices = @transform_11, window_bounds = array<i64: 128, 128>}, {pipeline_mode = #tpu.pipeline_mode<synchronous>, transform_indices = @transform_12, window_bounds = array<i64: 1, 128>}, {transform_indices = @transform_13, window_bounds = array<i64: 16, 128>}]} {
    %c0 = arith.constant 0 : index
    %c0_0 = arith.constant 0 : index
    %0 = vector.load %arg1[%c0, %c0_0] : memref<16x128xbf16, #tpu.memory_space<vmem>>, vector<16x128xbf16>
    %c0_1 = arith.constant 0 : index
    %c0_2 = arith.constant 0 : index
    %1 = vector.load %arg2[%c0_1, %c0_2] : memref<128x128xbf16, #tpu.memory_space<vmem>>, vector<128x128xbf16>
    %cst = arith.constant dense<0.000000e+00> : vector<16x128xf32>
    %2 = tpu.matmul %0, %1, %cst {dimension_numbers = #tpu.dot_dimension_numbers<[1], [0], [0], [1], [0, 0, 1, 1], [], []>} : vector<16x128xbf16>, vector<128x128xbf16>, vector<16x128xf32> -> vector<16x128xf32>
    %c0_3 = arith.constant 0 : index
    %c0_4 = arith.constant 0 : index
    %3 = vector.load %arg3[%c0_3, %c0_4] : memref<1x128xf32, #tpu.memory_space<vmem>>, vector<1x128xf32>
    %4 = vector.broadcast %3 : vector<1x128xf32> to vector<16x128xf32>
    %5 = arith.addf %2, %4 : vector<16x128xf32>
    %cst_5 = arith.constant 0.000000e+00 : f32
    %6 = vector.broadcast %cst_5 : f32 to vector<16x128xf32>
    %7 = arith.maximumf %5, %6 : vector<16x128xf32>
    %8 = arith.truncf %7 : vector<16x128xf32> to vector<16x128xbf16>
    %c0_6 = arith.constant 0 : index
    %c0_7 = arith.constant 0 : index
    %9 = vector.load %arg4[%c0_6, %c0_7] : memref<128x128xbf16, #tpu.memory_space<vmem>>, vector<128x128xbf16>
    %cst_8 = arith.constant dense<0.000000e+00> : vector<16x128xf32>
    %10 = tpu.matmul %8, %9, %cst_8 {dimension_numbers = #tpu.dot_dimension_numbers<[1], [0], [0], [1], [0, 0, 1, 1], [], []>} : vector<16x128xbf16>, vector<128x128xbf16>, vector<16x128xf32> -> vector<16x128xf32>
    %c0_9 = arith.constant 0 : index
    %c0_10 = arith.constant 0 : index
    %11 = vector.load %arg5[%c0_9, %c0_10] : memref<1x128xf32, #tpu.memory_space<vmem>>, vector<1x128xf32>
    %12 = vector.broadcast %11 : vector<1x128xf32> to vector<16x128xf32>
    %13 = arith.addf %10, %12 : vector<16x128xf32>
    %cst_11 = arith.constant 0.000000e+00 : f32
    %14 = vector.broadcast %cst_11 : f32 to vector<16x128xf32>
    %15 = arith.maximumf %13, %14 : vector<16x128xf32>
    %16 = arith.truncf %15 : vector<16x128xf32> to vector<16x128xbf16>
    %c0_12 = arith.constant 0 : index
    %c0_13 = arith.constant 0 : index
    %17 = vector.load %arg6[%c0_12, %c0_13] : memref<128x128xbf16, #tpu.memory_space<vmem>>, vector<128x128xbf16>
    %cst_14 = arith.constant dense<0.000000e+00> : vector<16x128xf32>
    %18 = tpu.matmul %16, %17, %cst_14 {dimension_numbers = #tpu.dot_dimension_numbers<[1], [0], [0], [1], [0, 0, 1, 1], [], []>} : vector<16x128xbf16>, vector<128x128xbf16>, vector<16x128xf32> -> vector<16x128xf32>
    %c0_15 = arith.constant 0 : index
    %c0_16 = arith.constant 0 : index
    %19 = vector.load %arg7[%c0_15, %c0_16] : memref<1x128xf32, #tpu.memory_space<vmem>>, vector<1x128xf32>
    %20 = vector.broadcast %19 : vector<1x128xf32> to vector<16x128xf32>
    %21 = arith.addf %18, %20 : vector<16x128xf32>
    %cst_17 = arith.constant 0.000000e+00 : f32
    %22 = vector.broadcast %cst_17 : f32 to vector<16x128xf32>
    %23 = arith.maximumf %21, %22 : vector<16x128xf32>
    %24 = arith.truncf %23 : vector<16x128xf32> to vector<16x128xbf16>
    %c0_18 = arith.constant 0 : index
    %c0_19 = arith.constant 0 : index
    %25 = vector.load %arg8[%c0_18, %c0_19] : memref<128x128xbf16, #tpu.memory_space<vmem>>, vector<128x128xbf16>
    %cst_20 = arith.constant dense<0.000000e+00> : vector<16x128xf32>
    %26 = tpu.matmul %24, %25, %cst_20 {dimension_numbers = #tpu.dot_dimension_numbers<[1], [0], [0], [1], [0, 0, 1, 1], [], []>} : vector<16x128xbf16>, vector<128x128xbf16>, vector<16x128xf32> -> vector<16x128xf32>
    %c0_21 = arith.constant 0 : index
    %c0_22 = arith.constant 0 : index
    %27 = vector.load %arg9[%c0_21, %c0_22] : memref<1x128xf32, #tpu.memory_space<vmem>>, vector<1x128xf32>
    %28 = vector.broadcast %27 : vector<1x128xf32> to vector<16x128xf32>
    %29 = arith.addf %26, %28 : vector<16x128xf32>
    %cst_23 = arith.constant 0.000000e+00 : f32
    %30 = vector.broadcast %cst_23 : f32 to vector<16x128xf32>
    %31 = arith.maximumf %29, %30 : vector<16x128xf32>
    %32 = arith.truncf %31 : vector<16x128xf32> to vector<16x128xbf16>
    %c0_24 = arith.constant 0 : index
    %c0_25 = arith.constant 0 : index
    %33 = vector.load %arg10[%c0_24, %c0_25] : memref<128x128xbf16, #tpu.memory_space<vmem>>, vector<128x128xbf16>
    %cst_26 = arith.constant dense<0.000000e+00> : vector<16x128xf32>
    %34 = tpu.matmul %32, %33, %cst_26 {dimension_numbers = #tpu.dot_dimension_numbers<[1], [0], [0], [1], [0, 0, 1, 1], [], []>} : vector<16x128xbf16>, vector<128x128xbf16>, vector<16x128xf32> -> vector<16x128xf32>
    %c0_27 = arith.constant 0 : index
    %c0_28 = arith.constant 0 : index
    %35 = vector.load %arg11[%c0_27, %c0_28] : memref<1x128xf32, #tpu.memory_space<vmem>>, vector<1x128xf32>
    %36 = vector.broadcast %35 : vector<1x128xf32> to vector<16x128xf32>
    %37 = arith.addf %34, %36 : vector<16x128xf32>
    %cst_29 = arith.constant 0.000000e+00 : f32
    %38 = vector.broadcast %cst_29 : f32 to vector<16x128xf32>
    %39 = arith.maximumf %37, %38 : vector<16x128xf32>
    %40 = arith.truncf %39 : vector<16x128xf32> to vector<16x128xbf16>
    %c0_30 = arith.constant 0 : index
    %c0_31 = arith.constant 0 : index
    %41 = vector.load %arg12[%c0_30, %c0_31] : memref<128x128xbf16, #tpu.memory_space<vmem>>, vector<128x128xbf16>
    %cst_32 = arith.constant dense<0.000000e+00> : vector<16x128xf32>
    %42 = tpu.matmul %40, %41, %cst_32 {dimension_numbers = #tpu.dot_dimension_numbers<[1], [0], [0], [1], [0, 0, 1, 1], [], []>} : vector<16x128xbf16>, vector<128x128xbf16>, vector<16x128xf32> -> vector<16x128xf32>
    %c0_33 = arith.constant 0 : index
    %c0_34 = arith.constant 0 : index
    %43 = vector.load %arg13[%c0_33, %c0_34] : memref<1x128xf32, #tpu.memory_space<vmem>>, vector<1x128xf32>
    %44 = vector.broadcast %43 : vector<1x128xf32> to vector<16x128xf32>
    %45 = arith.addf %42, %44 : vector<16x128xf32>
    %46 = arith.truncf %45 : vector<16x128xf32> to vector<16x128xbf16>
    %c0_35 = arith.constant 0 : index
    %c0_36 = arith.constant 0 : index
    %47 = vector.load %arg14[%c0_35, %c0_36] : memref<16x128xbf16, #tpu.memory_space<vmem>>, vector<16x128xbf16>
    tpu.vector_store %arg14[%c0_35, %c0_36], %46 {strides = array<i32>} : memref<16x128xbf16, #tpu.memory_space<vmem>>, vector<16x128xbf16>,
    return
  }
  func.func @transform_0(%arg0: i32) -> (i32, i32) {
    %c0_i32 = arith.constant 0 : i32
    %c0_i32_0 = arith.constant 0 : i32
    return %arg0, %c0_i32 : i32, i32
  }
  func.func @transform_1(%arg0: i32) -> (i32, i32) {
    %c0_i32 = arith.constant 0 : i32
    %c0_i32_0 = arith.constant 0 : i32
    %c0_i32_1 = arith.constant 0 : i32
    return %c0_i32, %c0_i32_0 : i32, i32
  }
  func.func @transform_2(%arg0: i32) -> (i32, i32) {
    %c0_i32 = arith.constant 0 : i32
    %c0_i32_0 = arith.constant 0 : i32
    %c0_i32_1 = arith.constant 0 : i32
    return %c0_i32, %c0_i32_0 : i32, i32
  }
  func.func @transform_3(%arg0: i32) -> (i32, i32) {
    %c0_i32 = arith.constant 0 : i32
    %c0_i32_0 = arith.constant 0 : i32
    %c0_i32_1 = arith.constant 0 : i32
    return %c0_i32, %c0_i32_0 : i32, i32
  }
  func.func @transform_4(%arg0: i32) -> (i32, i32) {
    %c0_i32 = arith.constant 0 : i32
    %c0_i32_0 = arith.constant 0 : i32
    %c0_i32_1 = arith.constant 0 : i32
    return %c0_i32, %c0_i32_0 : i32, i32
  }
  func.func @transform_5(%arg0: i32) -> (i32, i32) {
    %c0_i32 = arith.constant 0 : i32
    %c0_i32_0 = arith.constant 0 : i32
    %c0_i32_1 = arith.constant 0 : i32
    return %c0_i32, %c0_i32_0 : i32, i32
  }
  func.func @transform_6(%arg0: i32) -> (i32, i32) {
    %c0_i32 = arith.constant 0 : i32
    %c0_i32_0 = arith.constant 0 : i32
    %c0_i32_1 = arith.constant 0 : i32
    return %c0_i32, %c0_i32_0 : i32, i32
  }
  func.func @transform_7(%arg0: i32) -> (i32, i32) {
    %c0_i32 = arith.constant 0 : i32
    %c0_i32_0 = arith.constant 0 : i32
    %c0_i32_1 = arith.constant 0 : i32
    return %c0_i32, %c0_i32_0 : i32, i32
  }
  func.func @transform_8(%arg0: i32) -> (i32, i32) {
    %c0_i32 = arith.constant 0 : i32
    %c0_i32_0 = arith.constant 0 : i32
    %c0_i32_1 = arith.constant 0 : i32
    return %c0_i32, %c0_i32_0 : i32, i32
  }
  func.func @transform_9(%arg0: i32) -> (i32, i32) {
    %c0_i32 = arith.constant 0 : i32
    %c0_i32_0 = arith.constant 0 : i32
    %c0_i32_1 = arith.constant 0 : i32
    return %c0_i32, %c0_i32_0 : i32, i32
  }
  func.func @transform_10(%arg0: i32) -> (i32, i32) {
    %c0_i32 = arith.constant 0 : i32
    %c0_i32_0 = arith.constant 0 : i32
    %c0_i32_1 = arith.constant 0 : i32
    return %c0_i32, %c0_i32_0 : i32, i32
  }
  func.func @transform_11(%arg0: i32) -> (i32, i32) {
    %c0_i32 = arith.constant 0 : i32
    %c0_i32_0 = arith.constant 0 : i32
    %c0_i32_1 = arith.constant 0 : i32
    return %c0_i32, %c0_i32_0 : i32, i32
  }
  func.func @transform_12(%arg0: i32) -> (i32, i32) {
    %c0_i32 = arith.constant 0 : i32
    %c0_i32_0 = arith.constant 0 : i32
    %c0_i32_1 = arith.constant 0 : i32
    return %c0_i32, %c0_i32_0 : i32, i32
  }
  func.func @transform_13(%arg0: i32) -> (i32, i32) {
    %c0_i32 = arith.constant 0 : i32
    %c0_i32_0 = arith.constant 0 : i32
    return %arg0, %c0_i32 : i32, i32
  }
}

</mosaic_0001>

<llo_original>
// kernel: tpu_custom_call.1
$region0: #{tpu_custom_call.1}
  #allocation0 [shape = 'u32[]', space=smem, size = 0x4, offset = 0x4, fixed_abs, tag = 'smem constant byte address 0x4 - core index']
  #allocation1 [shape = 'u32[144,128]{1,0:T(1,128)}', space=vmem, size = 0x12000, scoped, tag = 'internal scratch']
  %s0 = inlined_call_operand.hbm [shape: bf16[16,128], index: 0, kind: input, shape index: {}]
  %s1 = inlined_call_operand.hbm [shape: bf16[128,128], index: 1, kind: input, shape index: {}]
  %s2 = inlined_call_operand.vmem [shape: f32[1,128], index: 2, kind: input, shape index: {}]
  %s3 = inlined_call_operand.hbm [shape: bf16[128,128], index: 3, kind: input, shape index: {}]
  %s4 = inlined_call_operand.vmem [shape: f32[1,128], index: 4, kind: input, shape index: {}]
  %s5 = inlined_call_operand.hbm [shape: bf16[128,128], index: 5, kind: input, shape index: {}]
  %s6 = inlined_call_operand.vmem [shape: f32[1,128], index: 6, kind: input, shape index: {}]
  %s7 = inlined_call_operand.hbm [shape: bf16[128,128], index: 7, kind: input, shape index: {}]
  %s8 = inlined_call_operand.vmem [shape: f32[1,128], index: 8, kind: input, shape index: {}]
  %s9 = inlined_call_operand.hbm [shape: bf16[128,128], index: 9, kind: input, shape index: {}]
  %s10 = inlined_call_operand.vmem [shape: f32[1,128], index: 10, kind: input, shape index: {}]
  %s11 = inlined_call_operand.hbm [shape: bf16[128,128], index: 11, kind: input, shape index: {}]
  %s12 = inlined_call_operand.vmem [shape: f32[1,128], index: 12, kind: input, shape index: {}]
  %s13 = inlined_call_operand.hbm [shape: bf16[16,128], index: 13, kind: output, shape index: {}]
  %s14 = sld [smem:[#allocation0]]
  $region90: #{tpu_custom_call.1} parent=0
    _
  %s16 = ssub.s32 1, %s14
  %s17 = scalar_select 0, %s16, %s14
  $region1: #{tpu_custom_call.1} parent=0
    #allocation2 [shape = 'u8[4096]{0}', space=vmem, size = 0x1000, scoped, tag = 'input window, operand 0, single buffered']
    #allocation3 [shape = 's32[1]{0}', space=sflag, size = 0x4, scoped, tag = 'scoped memory for tpu_custom_call.1']
    #allocation4 [shape = 's32[1]{0}', space=sflag, size = 0x4, scoped, tag = 'scoped memory for tpu_custom_call.1']
    #allocation5 [shape = 'u8[32768]{0}', space=vmem, size = 0x8000, scoped, tag = 'input window, operand 1, single buffered']
    #allocation6 [shape = 's32[1]{0}', space=sflag, size = 0x4, scoped, tag = 'scoped memory for tpu_custom_call.1']
    #allocation7 [shape = 'u8[32768]{0}', space=vmem, size = 0x8000, scoped, tag = 'input window, operand 3, single buffered']
    #allocation8 [shape = 'u8[32768]{0}', space=vmem, size = 0x8000, scoped, tag = 'input window, operand 5, single buffered']
    #allocation9 [shape = 's32[1]{0}', space=sflag, size = 0x4, scoped, tag = 'scoped memory for tpu_custom_call.1']
    #allocation10 [shape = 'u8[32768]{0}', space=vmem, size = 0x8000, scoped, tag = 'input window, operand 7, single buffered']
    #allocation11 [shape = 'u8[32768]{0}', space=vmem, size = 0x8000, scoped, tag = 'input window, operand 9, single buffered']
    #allocation12 [shape = 's32[1]{0}', space=sflag, size = 0x4, scoped, tag = 'scoped memory for tpu_custom_call.1']
    #allocation13 [shape = 'u8[32768]{0}', space=vmem, size = 0x8000, scoped, tag = 'input window, operand 11, single buffered']
    #allocation14 [shape = 'u8[4096]{0}', space=vmem, size = 0x1000, scoped, tag = 'output window, operand 0, single buffered']
    %18 = vsyncpa [#allocation3], 0
    %19 = vsyncpa [#allocation6], 0
    %20 = vsyncpa [#allocation9], 0
    %21 = vsyncpa [#allocation12], 0
    %22 = vsyncpa [#allocation4], 0
    // Predicated region
    $region2: #{tpu_custom_call.1} parent=1 // pred_check
      _
    $region3: #{tpu_custom_call.1} parent=1 // pred_check_branch
      %24 = sbr.rel (0) target = $region5
    $region4: #{tpu_custom_call.1} parent=1 // pred_region
      %s26 = ssub.s32 128, 128
      %27 = vsyncadd [#allocation3], %s26
      %s28 = sshll.u32 [#allocation2], 4
      %s29 = int_to_ptr.vmem [resolvable:$true] %s28
      %34 = dma.hbm_to_vmem [thread:$0]  %s0, 128, %s29, [#allocation3], 64, 64, 4
    $region5: #{tpu_custom_call.1} parent=1 // pred_fallthru
      _
    // Predicated region
    $region6: #{tpu_custom_call.1} parent=1 // pred_check
      _
    $region7: #{tpu_custom_call.1} parent=1 // pred_check_branch
      %36 = sbr.rel (0) target = $region9
    $region8: #{tpu_custom_call.1} parent=1 // pred_region
      %s38 = ssub.s32 1024, 1024
      %39 = vsyncadd [#allocation6], %s38
      %s40 = sshll.u32 [#allocation5], 4
      %s41 = int_to_ptr.vmem [resolvable:$true] %s40
      %46 = dma.hbm_to_vmem [thread:$0]  %s1, 1024, %s41, [#allocation6], 64, 64, 4
    $region9: #{tpu_custom_call.1} parent=1 // pred_fallthru
      _
    // Predicated region
    $region10: #{tpu_custom_call.1} parent=1 // pred_check
      _
    $region11: #{tpu_custom_call.1} parent=1 // pred_check_branch
      %48 = sbr.rel (0) target = $region13
    $region12: #{tpu_custom_call.1} parent=1 // pred_region
      _
    $region13: #{tpu_custom_call.1} parent=1 // pred_fallthru
      _
    // Predicated region
    $region14: #{tpu_custom_call.1} parent=1 // pred_check
      _
    $region15: #{tpu_custom_call.1} parent=1 // pred_check_branch
      %50 = sbr.rel (0) target = $region17
    $region16: #{tpu_custom_call.1} parent=1 // pred_region
      %s52 = ssub.s32 1024, 1024
      %53 = vsyncadd [#allocation6], %s52
      %s54 = sshll.u32 [#allocation7], 4
      %s55 = int_to_ptr.vmem [resolvable:$true] %s54
      %60 = dma.hbm_to_vmem [thread:$0]  %s3, 1024, %s55, [#allocation6], 64, 64, 4
    $region17: #{tpu_custom_call.1} parent=1 // pred_fallthru
      _
    // Predicated region
    $region18: #{tpu_custom_call.1} parent=1 // pred_check
      _
    $region19: #{tpu_custom_call.1} parent=1 // pred_check_branch
      %62 = sbr.rel (0) target = $region21
    $region20: #{tpu_custom_call.1} parent=1 // pred_region
      _
    $region21: #{tpu_custom_call.1} parent=1 // pred_fallthru
      _
    // Predicated region
    $region22: #{tpu_custom_call.1} parent=1 // pred_check
      _
    $region23: #{tpu_custom_call.1} parent=1 // pred_check_branch
      %64 = sbr.rel (0) target = $region25
    $region24: #{tpu_custom_call.1} parent=1 // pred_region
      %s66 = ssub.s32 1024, 1024
      %67 = vsyncadd [#allocation9], %s66
      %s68 = sshll.u32 [#allocation8], 4
      %s69 = int_to_ptr.vmem [resolvable:$true] %s68
      %74 = dma.hbm_to_vmem [thread:$0]  %s5, 1024, %s69, [#allocation9], 64, 64, 4
    $region25: #{tpu_custom_call.1} parent=1 // pred_fallthru
      _
    // Predicated region
    $region26: #{tpu_custom_call.1} parent=1 // pred_check
      _
    $region27: #{tpu_custom_call.1} parent=1 // pred_check_branch
      %76 = sbr.rel (0) target = $region29
    $region28: #{tpu_custom_call.1} parent=1 // pred_region
      _
    $region29: #{tpu_custom_call.1} parent=1 // pred_fallthru
      _
    // Predicated region
    $region30: #{tpu_custom_call.1} parent=1 // pred_check
      _
    $region31: #{tpu_custom_call.1} parent=1 // pred_check_branch
      %78 = sbr.rel (0) target = $region33
    $region32: #{tpu_custom_call.1} parent=1 // pred_region
      %s80 = ssub.s32 1024, 1024
      %81 = vsyncadd [#allocation9], %s80
      %s82 = sshll.u32 [#allocation10], 4
      %s83 = int_to_ptr.vmem [resolvable:$true] %s82
      %88 = dma.hbm_to_vmem [thread:$0]  %s7, 1024, %s83, [#allocation9], 64, 64, 4
    $region33: #{tpu_custom_call.1} parent=1 // pred_fallthru
      _
    // Predicated region
    $region34: #{tpu_custom_call.1} parent=1 // pred_check
      _
    $region35: #{tpu_custom_call.1} parent=1 // pred_check_branch
      %90 = sbr.rel (0) target = $region37
    $region36: #{tpu_custom_call.1} parent=1 // pred_region
      _
    $region37: #{tpu_custom_call.1} parent=1 // pred_fallthru
      _
    // Predicated region
    $region38: #{tpu_custom_call.1} parent=1 // pred_check
      _
    $region39: #{tpu_custom_call.1} parent=1 // pred_check_branch
      %92 = sbr.rel (0) target = $region41
    $region40: #{tpu_custom_call.1} parent=1 // pred_region
      %s94 = ssub.s32 1024, 1024
      %95 = vsyncadd [#allocation12], %s94
      %s96 = sshll.u32 [#allocation11], 4
      %s97 = int_to_ptr.vmem [resolvable:$true] %s96
      %102 = dma.hbm_to_vmem [thread:$0]  %s9, 1024, %s97, [#allocation12], 64, 64, 4
    $region41: #{tpu_custom_call.1} parent=1 // pred_fallthru
      _
    // Predicated region
    $region42: #{tpu_custom_call.1} parent=1 // pred_check
      _
    $region43: #{tpu_custom_call.1} parent=1 // pred_check_branch
      %104 = sbr.rel (0) target = $region45
    $region44: #{tpu_custom_call.1} parent=1 // pred_region
      _
    $region45: #{tpu_custom_call.1} parent=1 // pred_fallthru
      _
    // Predicated region
    $region46: #{tpu_custom_call.1} parent=1 // pred_check
      _
    $region47: #{tpu_custom_call.1} parent=1 // pred_check_branch
      %106 = sbr.rel (0) target = $region49
    $region48: #{tpu_custom_call.1} parent=1 // pred_region
      %s108 = ssub.s32 1024, 1024
      %109 = vsyncadd [#allocation12], %s108
      %s110 = sshll.u32 [#allocation13], 4
      %s111 = int_to_ptr.vmem [resolvable:$true] %s110
      %116 = dma.hbm_to_vmem [thread:$0]  %s11, 1024, %s111, [#allocation12], 64, 64, 4
    $region49: #{tpu_custom_call.1} parent=1 // pred_fallthru
      _
    // Predicated region
    $region50: #{tpu_custom_call.1} parent=1 // pred_check
      _
    $region51: #{tpu_custom_call.1} parent=1 // pred_check_branch
      %118 = sbr.rel (0) target = $region53
    $region52: #{tpu_custom_call.1} parent=1 // pred_region
      _
    $region53: #{tpu_custom_call.1} parent=1 // pred_fallthru
      _
    // Predicated region
    $region54: #{tpu_custom_call.1} parent=1 // pred_check
      _
    $region55: #{tpu_custom_call.1} parent=1 // pred_check_branch
      %120 = sbr.rel (0) target = $region57
    $region56: #{tpu_custom_call.1} parent=1 // pred_region
      %121 = dma.done [#allocation3], 128
    $region57: #{tpu_custom_call.1} parent=1 // pred_fallthru
      _
    // Predicated region
    $region58: #{tpu_custom_call.1} parent=1 // pred_check
      _
    $region59: #{tpu_custom_call.1} parent=1 // pred_check_branch
      %123 = sbr.rel (0) target = $region61
    $region60: #{tpu_custom_call.1} parent=1 // pred_region
      %124 = dma.done [#allocation6], 1024
    $region61: #{tpu_custom_call.1} parent=1 // pred_fallthru
      _
    // Predicated region
    $region62: #{tpu_custom_call.1} parent=1 // pred_check
      _
    $region63: #{tpu_custom_call.1} parent=1 // pred_check_branch
      %126 = sbr.rel (0) target = $region65
    $region64: #{tpu_custom_call.1} parent=1 // pred_region
      %127 = dma.done [#allocation6], 1024
    $region65: #{tpu_custom_call.1} parent=1 // pred_fallthru
      _
    // Predicated region
    $region66: #{tpu_custom_call.1} parent=1 // pred_check
      _
    $region67: #{tpu_custom_call.1} parent=1 // pred_check_branch
      %129 = sbr.rel (0) target = $region69
    $region68: #{tpu_custom_call.1} parent=1 // pred_region
      %130 = dma.done [#allocation9], 1024
    $region69: #{tpu_custom_call.1} parent=1 // pred_fallthru
      _
    // Predicated region
    $region70: #{tpu_custom_call.1} parent=1 // pred_check
      _
    $region71: #{tpu_custom_call.1} parent=1 // pred_check_branch
      %132 = sbr.rel (0) target = $region73
    $region72: #{tpu_custom_call.1} parent=1 // pred_region
      %133 = dma.done [#allocation9], 1024
    $region73: #{tpu_custom_call.1} parent=1 // pred_fallthru
      _
    // Predicated region
    $region74: #{tpu_custom_call.1} parent=1 // pred_check
      _
    $region75: #{tpu_custom_call.1} parent=1 // pred_check_branch
      %135 = sbr.rel (0) target = $region77
    $region76: #{tpu_custom_call.1} parent=1 // pred_region
      %136 = dma.done [#allocation12], 1024
    $region77: #{tpu_custom_call.1} parent=1 // pred_fallthru
      _
    // Predicated region
    $region78: #{tpu_custom_call.1} parent=1 // pred_check
      _
    $region79: #{tpu_custom_call.1} parent=1 // pred_check_branch
      %138 = sbr.rel (0) target = $region81
    $region80: #{tpu_custom_call.1} parent=1 // pred_region
      %139 = dma.done [#allocation12], 1024
    $region81: #{tpu_custom_call.1} parent=1 // pred_fallthru
      _
    %v141 = vld [vmem:[#allocation2] sm:$0xf]
    %v142 = vld [vmem:[#allocation2 + $0x4] sm:$0xf]
    %v143 = vld [vmem:[#allocation5] sm:$0xf]
    %v144 = vld [vmem:[#allocation5 + $0x4] sm:$0xf]
    %v145 = vld [vmem:[#allocation5 + $0x8] sm:$0xf]
    %v146 = vld [vmem:[#allocation5 + $0xc] sm:$0xf]
    %v147 = vld [vmem:[#allocation5 + $0x10] sm:$0xf]
    %v148 = vld [vmem:[#allocation5 + $0x14] sm:$0xf]
    %v149 = vld [vmem:[#allocation5 + $0x18] sm:$0xf]
    %v150 = vld [vmem:[#allocation5 + $0x1c] sm:$0xf]
    %v151 = vld [vmem:[#allocation5 + $0x20] sm:$0xf]
    %v152 = vld [vmem:[#allocation5 + $0x24] sm:$0xf]
    %v153 = vld [vmem:[#allocation5 + $0x28] sm:$0xf]
    %v154 = vld [vmem:[#allocation5 + $0x2c] sm:$0xf]
    %v155 = vld [vmem:[#allocation5 + $0x30] sm:$0xf]
    %v156 = vld [vmem:[#allocation5 + $0x34] sm:$0xf]
    %v157 = vld [vmem:[#allocation5 + $0x38] sm:$0xf]
    %v158 = vld [vmem:[#allocation5 + $0x3c] sm:$0xf]
    %v159 = vld [vmem:[%s2] sm:$0x1]
    %v161 = vlaneseq
    %v162 = vshrl.u32 %v161, 7
    %v163 = vsub.s32 0, %v162
    %v164 = vrot.slane %v159, %v163
    %v168 = vunpack.c.l.b16 %v141
    %v169 = vunpack.c.l.b16 %v142
    %v170 = vpack.c.b16 %v169, %v168
    %v188 = vunpack.c.l.b16 %v143
    %v189 = vunpack.c.l.b16 %v144
    %v190 = vunpack.c.l.b16 %v145
    %v191 = vunpack.c.l.b16 %v146
    %v192 = vunpack.c.l.b16 %v147
    %v193 = vunpack.c.l.b16 %v148
    %v194 = vunpack.c.l.b16 %v149
    %v195 = vunpack.c.l.b16 %v150
    %v196 = vunpack.c.l.b16 %v151
    %v197 = vunpack.c.l.b16 %v152
    %v198 = vunpack.c.l.b16 %v153
    %v199 = vunpack.c.l.b16 %v154
    %v200 = vunpack.c.l.b16 %v155
    %v201 = vunpack.c.l.b16 %v156
    %v202 = vunpack.c.l.b16 %v157
    %v203 = vunpack.c.l.b16 %v158
    %v204 = vpack.c.b16 %v189, %v188
    %v205 = vpack.c.b16 %v191, %v190
    %v206 = vpack.c.b16 %v193, %v192
    %v207 = vpack.c.b16 %v195, %v194
    %v208 = vpack.c.b16 %v197, %v196
    %v209 = vpack.c.b16 %v199, %v198
    %v210 = vpack.c.b16 %v201, %v200
    %v211 = vpack.c.b16 %v203, %v202
    %220 = vmatprep.subr.bf16.mxu0 0
    %221 = vmatpush1.bf16.msra.mxu0 %v204
    %222 = vmatprep.subr.bf16.mxu0 0
    %223 = vmatpush1.bf16.msra.mxu0 %v205
    %224 = vmatprep.subr.bf16.mxu0 0
    %225 = vmatpush1.bf16.msra.mxu0 %v206
    %226 = vmatprep.subr.bf16.mxu0 0
    %227 = vmatpush1.bf16.msra.mxu0 %v207
    %228 = vmatprep.subr.bf16.mxu0 0
    %229 = vmatpush1.bf16.msra.mxu0 %v208
    %230 = vmatprep.subr.bf16.mxu0 0
    %231 = vmatpush1.bf16.msra.mxu0 %v209
    %232 = vmatprep.subr.bf16.mxu0 0
    %233 = vmatpush1.bf16.msra.mxu0 %v210
    %234 = vmatprep.subr.bf16.mxu0 0
    %235 = vmatpush1.bf16.msra.mxu0 %v211
    %236 = vmatprep.subr.bf16.mxu0 0
    %237 = vmatpush1.bf16.msra.mxu0 0
    %238 = vmatprep.subr.bf16.mxu0 0
    %239 = vmatpush1.bf16.msra.mxu0 0
    %240 = vmatprep.subr.bf16.mxu0 0
    %241 = vmatpush1.bf16.msra.mxu0 0
    %242 = vmatprep.subr.bf16.mxu0 0
    %243 = vmatpush1.bf16.msra.mxu0 0
    %244 = vmatprep.subr.bf16.mxu0 0
    %245 = vmatpush1.bf16.msra.mxu0 0
    %246 = vmatprep.subr.bf16.mxu0 0
    %247 = vmatpush1.bf16.msra.mxu0 0
    %248 = vmatprep.subr.bf16.mxu0 0
    %249 = vmatpush1.bf16.msra.mxu0 0
    %250 = vmatprep.subr.bf16.mxu0 0
    %251 = vmatpush1.bf16.msra.mxu0 0
    %252 = vmatprep.mubr.bf16.mxu0 0
    %253 = vmatmul.mubr.bf16.gmra.mrb[0].mxu0 %v170
    %v254 = vpop.f32.mrb[0].mxu0
    %v255 = vadd.f32 %v164, %v254
    %v256 = vpop.f32.mrb[0].mxu0
    %v257 = vpop.f32.mrb[0].mxu0
    %v258 = vadd.f32 %v164, %v257
    %v259 = vpop.f32.mrb[0].mxu0
    %260 = vdwg.mxu0
    %v261 = vmax.f32 %v255, 0.0
    %v262 = vmax.f32 %v258, 0.0
    %v263 = vpack.c.bf16 %v262, %v261
    %v264 = vld [vmem:[#allocation7] sm:$0xf]
    %v265 = vld [vmem:[#allocation7 + $0x4] sm:$0xf]
    %v266 = vld [vmem:[#allocation7 + $0x8] sm:$0xf]
    %v267 = vld [vmem:[#allocation7 + $0xc] sm:$0xf]
    %v268 = vld [vmem:[#allocation7 + $0x10] sm:$0xf]
    %v269 = vld [vmem:[#allocation7 + $0x14] sm:$0xf]
    %v270 = vld [vmem:[#allocation7 + $0x18] sm:$0xf]
    %v271 = vld [vmem:[#allocation7 + $0x1c] sm:$0xf]
    %v272 = vld [vmem:[#allocation7 + $0x20] sm:$0xf]
    %v273 = vld [vmem:[#allocation7 + $0x24] sm:$0xf]
    %v274 = vld [vmem:[#allocation7 + $0x28] sm:$0xf]
    %v275 = vld [vmem:[#allocation7 + $0x2c] sm:$0xf]
    %v276 = vld [vmem:[#allocation7 + $0x30] sm:$0xf]
    %v277 = vld [vmem:[#allocation7 + $0x34] sm:$0xf]
    %v278 = vld [vmem:[#allocation7 + $0x38] sm:$0xf]
    %v279 = vld [vmem:[#allocation7 + $0x3c] sm:$0xf]
    %v280 = vld [vmem:[%s4] sm:$0x1]
    %v282 = vlaneseq
    %v283 = vshrl.u32 %v282, 7
    %v284 = vsub.s32 0, %v283
    %v285 = vrot.slane %v280, %v284
    %v303 = vunpack.c.l.b16 %v264
    %v304 = vunpack.c.l.b16 %v265
    %v305 = vunpack.c.l.b16 %v266
    %v306 = vunpack.c.l.b16 %v267
    %v307 = vunpack.c.l.b16 %v268
    %v308 = vunpack.c.l.b16 %v269
    %v309 = vunpack.c.l.b16 %v270
    %v310 = vunpack.c.l.b16 %v271
    %v311 = vunpack.c.l.b16 %v272
    %v312 = vunpack.c.l.b16 %v273
    %v313 = vunpack.c.l.b16 %v274
    %v314 = vunpack.c.l.b16 %v275
    %v315 = vunpack.c.l.b16 %v276
    %v316 = vunpack.c.l.b16 %v277
    %v317 = vunpack.c.l.b16 %v278
    %v318 = vunpack.c.l.b16 %v279
    %v319 = vpack.c.b16 %v304, %v303
    %v320 = vpack.c.b16 %v306, %v305
    %v321 = vpack.c.b16 %v308, %v307
    %v322 = vpack.c.b16 %v310, %v309
    %v323 = vpack.c.b16 %v312, %v311
    %v324 = vpack.c.b16 %v314, %v313
    %v325 = vpack.c.b16 %v316, %v315
    %v326 = vpack.c.b16 %v318, %v317
    %335 = vmatprep.subr.bf16.mxu0 0
    %336 = vmatpush1.bf16.msra.mxu0 %v319
    %337 = vmatprep.subr.bf16.mxu0 0
    %338 = vmatpush1.bf16.msra.mxu0 %v320
    %339 = vmatprep.subr.bf16.mxu0 0
    %340 = vmatpush1.bf16.msra.mxu0 %v321
    %341 = vmatprep.subr.bf16.mxu0 0
    %342 = vmatpush1.bf16.msra.mxu0 %v322
    %343 = vmatprep.subr.bf16.mxu0 0
    %344 = vmatpush1.bf16.msra.mxu0 %v323
    %345 = vmatprep.subr.bf16.mxu0 0
    %346 = vmatpush1.bf16.msra.mxu0 %v324
    %347 = vmatprep.subr.bf16.mxu0 0
    %348 = vmatpush1.bf16.msra.mxu0 %v325
    %349 = vmatprep.subr.bf16.mxu0 0
    %350 = vmatpush1.bf16.msra.mxu0 %v326
    %351 = vmatprep.subr.bf16.mxu0 0
    %352 = vmatpush1.bf16.msra.mxu0 0
    %353 = vmatprep.subr.bf16.mxu0 0
    %354 = vmatpush1.bf16.msra.mxu0 0
    %355 = vmatprep.subr.bf16.mxu0 0
    %356 = vmatpush1.bf16.msra.mxu0 0
    %357 = vmatprep.subr.bf16.mxu0 0
    %358 = vmatpush1.bf16.msra.mxu0 0
    %359 = vmatprep.subr.bf16.mxu0 0
    %360 = vmatpush1.bf16.msra.mxu0 0
    %361 = vmatprep.subr.bf16.mxu0 0
    %362 = vmatpush1.bf16.msra.mxu0 0
    %363 = vmatprep.subr.bf16.mxu0 0
    %364 = vmatpush1.bf16.msra.mxu0 0
    %365 = vmatprep.subr.bf16.mxu0 0
    %366 = vmatpush1.bf16.msra.mxu0 0
    %367 = vmatprep.mubr.bf16.mxu0 0
    %368 = vmatmul.mubr.bf16.gmra.mrb[0].mxu0 %v263
    %v369 = vpop.f32.mrb[0].mxu0
    %v370 = vadd.f32 %v285, %v369
    %v371 = vpop.f32.mrb[0].mxu0
    %v372 = vpop.f32.mrb[0].mxu0
    %v373 = vadd.f32 %v285, %v372
    %v374 = vpop.f32.mrb[0].mxu0
    %375 = vdwg.mxu0
    %v376 = vmax.f32 %v370, 0.0
    %v377 = vmax.f32 %v373, 0.0
    %v378 = vpack.c.bf16 %v377, %v376
    %v379 = vld [vmem:[#allocation8] sm:$0xf]
    %v380 = vld [vmem:[#allocation8 + $0x4] sm:$0xf]
    %v381 = vld [vmem:[#allocation8 + $0x8] sm:$0xf]
    %v382 = vld [vmem:[#allocation8 + $0xc] sm:$0xf]
    %v383 = vld [vmem:[#allocation8 + $0x10] sm:$0xf]
    %v384 = vld [vmem:[#allocation8 + $0x14] sm:$0xf]
    %v385 = vld [vmem:[#allocation8 + $0x18] sm:$0xf]
    %v386 = vld [vmem:[#allocation8 + $0x1c] sm:$0xf]
    %v387 = vld [vmem:[#allocation8 + $0x20] sm:$0xf]
    %v388 = vld [vmem:[#allocation8 + $0x24] sm:$0xf]
    %v389 = vld [vmem:[#allocation8 + $0x28] sm:$0xf]
    %v390 = vld [vmem:[#allocation8 + $0x2c] sm:$0xf]
    %v391 = vld [vmem:[#allocation8 + $0x30] sm:$0xf]
    %v392 = vld [vmem:[#allocation8 + $0x34] sm:$0xf]
    %v393 = vld [vmem:[#allocation8 + $0x38] sm:$0xf]
    %v394 = vld [vmem:[#allocation8 + $0x3c] sm:$0xf]
    %v395 = vld [vmem:[%s6] sm:$0x1]
    %v397 = vlaneseq
    %v398 = vshrl.u32 %v397, 7
    %v399 = vsub.s32 0, %v398
    %v400 = vrot.slane %v395, %v399
    %v418 = vunpack.c.l.b16 %v379
    %v419 = vunpack.c.l.b16 %v380
    %v420 = vunpack.c.l.b16 %v381
    %v421 = vunpack.c.l.b16 %v382
    %v422 = vunpack.c.l.b16 %v383
    %v423 = vunpack.c.l.b16 %v384
    %v424 = vunpack.c.l.b16 %v385
    %v425 = vunpack.c.l.b16 %v386
    %v426 = vunpack.c.l.b16 %v387
    %v427 = vunpack.c.l.b16 %v388
    %v428 = vunpack.c.l.b16 %v389
    %v429 = vunpack.c.l.b16 %v390
    %v430 = vunpack.c.l.b16 %v391
    %v431 = vunpack.c.l.b16 %v392
    %v432 = vunpack.c.l.b16 %v393
    %v433 = vunpack.c.l.b16 %v394
    %v434 = vpack.c.b16 %v419, %v418
    %v435 = vpack.c.b16 %v421, %v420
    %v436 = vpack.c.b16 %v423, %v422
    %v437 = vpack.c.b16 %v425, %v424
    %v438 = vpack.c.b16 %v427, %v426
    %v439 = vpack.c.b16 %v429, %v428
    %v440 = vpack.c.b16 %v431, %v430
    %v441 = vpack.c.b16 %v433, %v432
    %450 = vmatprep.subr.bf16.mxu0 0
    %451 = vmatpush1.bf16.msra.mxu0 %v434
    %452 = vmatprep.subr.bf16.mxu0 0
    %453 = vmatpush1.bf16.msra.mxu0 %v435
    %454 = vmatprep.subr.bf16.mxu0 0
    %455 = vmatpush1.bf16.msra.mxu0 %v436
    %456 = vmatprep.subr.bf16.mxu0 0
    %457 = vmatpush1.bf16.msra.mxu0 %v437
    %458 = vmatprep.subr.bf16.mxu0 0
    %459 = vmatpush1.bf16.msra.mxu0 %v438
    %460 = vmatprep.subr.bf16.mxu0 0
    %461 = vmatpush1.bf16.msra.mxu0 %v439
    %462 = vmatprep.subr.bf16.mxu0 0
    %463 = vmatpush1.bf16.msra.mxu0 %v440
    %464 = vmatprep.subr.bf16.mxu0 0
    %465 = vmatpush1.bf16.msra.mxu0 %v441
    %466 = vmatprep.subr.bf16.mxu0 0
    %467 = vmatpush1.bf16.msra.mxu0 0
    %468 = vmatprep.subr.bf16.mxu0 0
    %469 = vmatpush1.bf16.msra.mxu0 0
    %470 = vmatprep.subr.bf16.mxu0 0
    %471 = vmatpush1.bf16.msra.mxu0 0
    %472 = vmatprep.subr.bf16.mxu0 0
    %473 = vmatpush1.bf16.msra.mxu0 0
    %474 = vmatprep.subr.bf16.mxu0 0
    %475 = vmatpush1.bf16.msra.mxu0 0
    %476 = vmatprep.subr.bf16.mxu0 0
    %477 = vmatpush1.bf16.msra.mxu0 0
    %478 = vmatprep.subr.bf16.mxu0 0
    %479 = vmatpush1.bf16.msra.mxu0 0
    %480 = vmatprep.subr.bf16.mxu0 0
    %481 = vmatpush1.bf16.msra.mxu0 0
    %482 = vmatprep.mubr.bf16.mxu0 0
    %483 = vmatmul.mubr.bf16.gmra.mrb[0].mxu0 %v378
    %v484 = vpop.f32.mrb[0].mxu0
    %v485 = vadd.f32 %v400, %v484
    %v486 = vpop.f32.mrb[0].mxu0
    %v487 = vpop.f32.mrb[0].mxu0
    %v488 = vadd.f32 %v400, %v487
    %v489 = vpop.f32.mrb[0].mxu0
    %490 = vdwg.mxu0
    %v491 = vmax.f32 %v485, 0.0
    %v492 = vmax.f32 %v488, 0.0
    %v493 = vpack.c.bf16 %v492, %v491
    %v494 = vld [vmem:[#allocation10] sm:$0xf]
    %v495 = vld [vmem:[#allocation10 + $0x4] sm:$0xf]
    %v496 = vld [vmem:[#allocation10 + $0x8] sm:$0xf]
    %v497 = vld [vmem:[#allocation10 + $0xc] sm:$0xf]
    %v498 = vld [vmem:[#allocation10 + $0x10] sm:$0xf]
    %v499 = vld [vmem:[#allocation10 + $0x14] sm:$0xf]
    %v500 = vld [vmem:[#allocation10 + $0x18] sm:$0xf]
    %v501 = vld [vmem:[#allocation10 + $0x1c] sm:$0xf]
    %v502 = vld [vmem:[#allocation10 + $0x20] sm:$0xf]
    %v503 = vld [vmem:[#allocation10 + $0x24] sm:$0xf]
    %v504 = vld [vmem:[#allocation10 + $0x28] sm:$0xf]
    %v505 = vld [vmem:[#allocation10 + $0x2c] sm:$0xf]
    %v506 = vld [vmem:[#allocation10 + $0x30] sm:$0xf]
    %v507 = vld [vmem:[#allocation10 + $0x34] sm:$0xf]
    %v508 = vld [vmem:[#allocation10 + $0x38] sm:$0xf]
    %v509 = vld [vmem:[#allocation10 + $0x3c] sm:$0xf]
    %v510 = vld [vmem:[%s8] sm:$0x1]
    %v512 = vlaneseq
    %v513 = vshrl.u32 %v512, 7
    %v514 = vsub.s32 0, %v513
    %v515 = vrot.slane %v510, %v514
    %v533 = vunpack.c.l.b16 %v494
    %v534 = vunpack.c.l.b16 %v495
    %v535 = vunpack.c.l.b16 %v496
    %v536 = vunpack.c.l.b16 %v497
    %v537 = vunpack.c.l.b16 %v498
    %v538 = vunpack.c.l.b16 %v499
    %v539 = vunpack.c.l.b16 %v500
    %v540 = vunpack.c.l.b16 %v501
    %v541 = vunpack.c.l.b16 %v502
    %v542 = vunpack.c.l.b16 %v503
    %v543 = vunpack.c.l.b16 %v504
    %v544 = vunpack.c.l.b16 %v505
    %v545 = vunpack.c.l.b16 %v506
    %v546 = vunpack.c.l.b16 %v507
    %v547 = vunpack.c.l.b16 %v508
    %v548 = vunpack.c.l.b16 %v509
    %v549 = vpack.c.b16 %v534, %v533
    %v550 = vpack.c.b16 %v536, %v535
    %v551 = vpack.c.b16 %v538, %v537
    %v552 = vpack.c.b16 %v540, %v539
    %v553 = vpack.c.b16 %v542, %v541
    %v554 = vpack.c.b16 %v544, %v543
    %v555 = vpack.c.b16 %v546, %v545
    %v556 = vpack.c.b16 %v548, %v547
    %565 = vmatprep.subr.bf16.mxu0 0
    %566 = vmatpush1.bf16.msra.mxu0 %v549
    %567 = vmatprep.subr.bf16.mxu0 0
    %568 = vmatpush1.bf16.msra.mxu0 %v550
    %569 = vmatprep.subr.bf16.mxu0 0
    %570 = vmatpush1.bf16.msra.mxu0 %v551
    %571 = vmatprep.subr.bf16.mxu0 0
    %572 = vmatpush1.bf16.msra.mxu0 %v552
    %573 = vmatprep.subr.bf16.mxu0 0
    %574 = vmatpush1.bf16.msra.mxu0 %v553
    %575 = vmatprep.subr.bf16.mxu0 0
    %576 = vmatpush1.bf16.msra.mxu0 %v554
    %577 = vmatprep.subr.bf16.mxu0 0
    %578 = vmatpush1.bf16.msra.mxu0 %v555
    %579 = vmatprep.subr.bf16.mxu0 0
    %580 = vmatpush1.bf16.msra.mxu0 %v556
    %581 = vmatprep.subr.bf16.mxu0 0
    %582 = vmatpush1.bf16.msra.mxu0 0
    %583 = vmatprep.subr.bf16.mxu0 0
    %584 = vmatpush1.bf16.msra.mxu0 0
    %585 = vmatprep.subr.bf16.mxu0 0
    %586 = vmatpush1.bf16.msra.mxu0 0
    %587 = vmatprep.subr.bf16.mxu0 0
    %588 = vmatpush1.bf16.msra.mxu0 0
    %589 = vmatprep.subr.bf16.mxu0 0
    %590 = vmatpush1.bf16.msra.mxu0 0
    %591 = vmatprep.subr.bf16.mxu0 0
    %592 = vmatpush1.bf16.msra.mxu0 0
    %593 = vmatprep.subr.bf16.mxu0 0
    %594 = vmatpush1.bf16.msra.mxu0 0
    %595 = vmatprep.subr.bf16.mxu0 0
    %596 = vmatpush1.bf16.msra.mxu0 0
    %597 = vmatprep.mubr.bf16.mxu0 0
    %598 = vmatmul.mubr.bf16.gmra.mrb[0].mxu0 %v493
    %v599 = vpop.f32.mrb[0].mxu0
    %v600 = vadd.f32 %v515, %v599
    %v601 = vpop.f32.mrb[0].mxu0
    %v602 = vpop.f32.mrb[0].mxu0
    %v603 = vadd.f32 %v515, %v602
    %v604 = vpop.f32.mrb[0].mxu0
    %605 = vdwg.mxu0
    %v606 = vmax.f32 %v600, 0.0
    %v607 = vmax.f32 %v603, 0.0
    %v608 = vpack.c.bf16 %v607, %v606
    %v609 = vld [vmem:[#allocation11] sm:$0xf]
    %v610 = vld [vmem:[#allocation11 + $0x4] sm:$0xf]
    %v611 = vld [vmem:[#allocation11 + $0x8] sm:$0xf]
    %v612 = vld [vmem:[#allocation11 + $0xc] sm:$0xf]
    %v613 = vld [vmem:[#allocation11 + $0x10] sm:$0xf]
    %v614 = vld [vmem:[#allocation11 + $0x14] sm:$0xf]
    %v615 = vld [vmem:[#allocation11 + $0x18] sm:$0xf]
    %v616 = vld [vmem:[#allocation11 + $0x1c] sm:$0xf]
    %v617 = vld [vmem:[#allocation11 + $0x20] sm:$0xf]
    %v618 = vld [vmem:[#allocation11 + $0x24] sm:$0xf]
    %v619 = vld [vmem:[#allocation11 + $0x28] sm:$0xf]
    %v620 = vld [vmem:[#allocation11 + $0x2c] sm:$0xf]
    %v621 = vld [vmem:[#allocation11 + $0x30] sm:$0xf]
    %v622 = vld [vmem:[#allocation11 + $0x34] sm:$0xf]
    %v623 = vld [vmem:[#allocation11 + $0x38] sm:$0xf]
    %v624 = vld [vmem:[#allocation11 + $0x3c] sm:$0xf]
    %v625 = vld [vmem:[%s10] sm:$0x1]
    %v627 = vlaneseq
    %v628 = vshrl.u32 %v627, 7
    %v629 = vsub.s32 0, %v628
    %v630 = vrot.slane %v625, %v629
    %v648 = vunpack.c.l.b16 %v609
    %v649 = vunpack.c.l.b16 %v610
    %v650 = vunpack.c.l.b16 %v611
    %v651 = vunpack.c.l.b16 %v612
    %v652 = vunpack.c.l.b16 %v613
    %v653 = vunpack.c.l.b16 %v614
    %v654 = vunpack.c.l.b16 %v615
    %v655 = vunpack.c.l.b16 %v616
    %v656 = vunpack.c.l.b16 %v617
    %v657 = vunpack.c.l.b16 %v618
    %v658 = vunpack.c.l.b16 %v619
    %v659 = vunpack.c.l.b16 %v620
    %v660 = vunpack.c.l.b16 %v621
    %v661 = vunpack.c.l.b16 %v622
    %v662 = vunpack.c.l.b16 %v623
    %v663 = vunpack.c.l.b16 %v624
    %v664 = vpack.c.b16 %v649, %v648
    %v665 = vpack.c.b16 %v651, %v650
    %v666 = vpack.c.b16 %v653, %v652
    %v667 = vpack.c.b16 %v655, %v654
    %v668 = vpack.c.b16 %v657, %v656
    %v669 = vpack.c.b16 %v659, %v658
    %v670 = vpack.c.b16 %v661, %v660
    %v671 = vpack.c.b16 %v663, %v662
    %680 = vmatprep.subr.bf16.mxu0 0
    %681 = vmatpush1.bf16.msra.mxu0 %v664
    %682 = vmatprep.subr.bf16.mxu0 0
    %683 = vmatpush1.bf16.msra.mxu0 %v665
    %684 = vmatprep.subr.bf16.mxu0 0
    %685 = vmatpush1.bf16.msra.mxu0 %v666
    %686 = vmatprep.subr.bf16.mxu0 0
    %687 = vmatpush1.bf16.msra.mxu0 %v667
    %688 = vmatprep.subr.bf16.mxu0 0
    %689 = vmatpush1.bf16.msra.mxu0 %v668
    %690 = vmatprep.subr.bf16.mxu0 0
    %691 = vmatpush1.bf16.msra.mxu0 %v669
    %692 = vmatprep.subr.bf16.mxu0 0
    %693 = vmatpush1.bf16.msra.mxu0 %v670
    %694 = vmatprep.subr.bf16.mxu0 0
    %695 = vmatpush1.bf16.msra.mxu0 %v671
    %696 = vmatprep.subr.bf16.mxu0 0
    %697 = vmatpush1.bf16.msra.mxu0 0
    %698 = vmatprep.subr.bf16.mxu0 0
    %699 = vmatpush1.bf16.msra.mxu0 0
    %700 = vmatprep.subr.bf16.mxu0 0
    %701 = vmatpush1.bf16.msra.mxu0 0
    %702 = vmatprep.subr.bf16.mxu0 0
    %703 = vmatpush1.bf16.msra.mxu0 0
    %704 = vmatprep.subr.bf16.mxu0 0
    %705 = vmatpush1.bf16.msra.mxu0 0
    %706 = vmatprep.subr.bf16.mxu0 0
    %707 = vmatpush1.bf16.msra.mxu0 0
    %708 = vmatprep.subr.bf16.mxu0 0
    %709 = vmatpush1.bf16.msra.mxu0 0
    %710 = vmatprep.subr.bf16.mxu0 0
    %711 = vmatpush1.bf16.msra.mxu0 0
    %712 = vmatprep.mubr.bf16.mxu0 0
    %713 = vmatmul.mubr.bf16.gmra.mrb[0].mxu0 %v608
    %v714 = vpop.f32.mrb[0].mxu0
    %v715 = vadd.f32 %v630, %v714
    %v716 = vpop.f32.mrb[0].mxu0
    %v717 = vpop.f32.mrb[0].mxu0
    %v718 = vadd.f32 %v630, %v717
    %v719 = vpop.f32.mrb[0].mxu0
    %720 = vdwg.mxu0
    %v721 = vmax.f32 %v715, 0.0
    %v722 = vmax.f32 %v718, 0.0
    %v723 = vpack.c.bf16 %v722, %v721
    %v724 = vld [vmem:[#allocation13] sm:$0xf]
    %v725 = vld [vmem:[#allocation13 + $0x4] sm:$0xf]
    %v726 = vld [vmem:[#allocation13 + $0x8] sm:$0xf]
    %v727 = vld [vmem:[#allocation13 + $0xc] sm:$0xf]
    %v728 = vld [vmem:[#allocation13 + $0x10] sm:$0xf]
    %v729 = vld [vmem:[#allocation13 + $0x14] sm:$0xf]
    %v730 = vld [vmem:[#allocation13 + $0x18] sm:$0xf]
    %v731 = vld [vmem:[#allocation13 + $0x1c] sm:$0xf]
    %v732 = vld [vmem:[#allocation13 + $0x20] sm:$0xf]
    %v733 = vld [vmem:[#allocation13 + $0x24] sm:$0xf]
    %v734 = vld [vmem:[#allocation13 + $0x28] sm:$0xf]
    %v735 = vld [vmem:[#allocation13 + $0x2c] sm:$0xf]
    %v736 = vld [vmem:[#allocation13 + $0x30] sm:$0xf]
    %v737 = vld [vmem:[#allocation13 + $0x34] sm:$0xf]
    %v738 = vld [vmem:[#allocation13 + $0x38] sm:$0xf]
    %v739 = vld [vmem:[#allocation13 + $0x3c] sm:$0xf]
    %v740 = vld [vmem:[%s12] sm:$0x1]
    %v742 = vlaneseq
    %v743 = vshrl.u32 %v742, 7
    %v744 = vsub.s32 0, %v743
    %v745 = vrot.slane %v740, %v744
    %v763 = vunpack.c.l.b16 %v724
    %v764 = vunpack.c.l.b16 %v725
    %v765 = vunpack.c.l.b16 %v726
    %v766 = vunpack.c.l.b16 %v727
    %v767 = vunpack.c.l.b16 %v728
    %v768 = vunpack.c.l.b16 %v729
    %v769 = vunpack.c.l.b16 %v730
    %v770 = vunpack.c.l.b16 %v731
    %v771 = vunpack.c.l.b16 %v732
    %v772 = vunpack.c.l.b16 %v733
    %v773 = vunpack.c.l.b16 %v734
    %v774 = vunpack.c.l.b16 %v735
    %v775 = vunpack.c.l.b16 %v736
    %v776 = vunpack.c.l.b16 %v737
    %v777 = vunpack.c.l.b16 %v738
    %v778 = vunpack.c.l.b16 %v739
    %v779 = vpack.c.b16 %v764, %v763
    %v780 = vpack.c.b16 %v766, %v765
    %v781 = vpack.c.b16 %v768, %v767
    %v782 = vpack.c.b16 %v770, %v769
    %v783 = vpack.c.b16 %v772, %v771
    %v784 = vpack.c.b16 %v774, %v773
    %v785 = vpack.c.b16 %v776, %v775
    %v786 = vpack.c.b16 %v778, %v777
    %795 = vmatprep.subr.bf16.mxu0 0
    %796 = vmatpush1.bf16.msra.mxu0 %v779
    %797 = vmatprep.subr.bf16.mxu0 0
    %798 = vmatpush1.bf16.msra.mxu0 %v780
    %799 = vmatprep.subr.bf16.mxu0 0
    %800 = vmatpush1.bf16.msra.mxu0 %v781
    %801 = vmatprep.subr.bf16.mxu0 0
    %802 = vmatpush1.bf16.msra.mxu0 %v782
    %803 = vmatprep.subr.bf16.mxu0 0
    %804 = vmatpush1.bf16.msra.mxu0 %v783
    %805 = vmatprep.subr.bf16.mxu0 0
    %806 = vmatpush1.bf16.msra.mxu0 %v784
    %807 = vmatprep.subr.bf16.mxu0 0
    %808 = vmatpush1.bf16.msra.mxu0 %v785
    %809 = vmatprep.subr.bf16.mxu0 0
    %810 = vmatpush1.bf16.msra.mxu0 %v786
    %811 = vmatprep.subr.bf16.mxu0 0
    %812 = vmatpush1.bf16.msra.mxu0 0
    %813 = vmatprep.subr.bf16.mxu0 0
    %814 = vmatpush1.bf16.msra.mxu0 0
    %815 = vmatprep.subr.bf16.mxu0 0
    %816 = vmatpush1.bf16.msra.mxu0 0
    %817 = vmatprep.subr.bf16.mxu0 0
    %818 = vmatpush1.bf16.msra.mxu0 0
    %819 = vmatprep.subr.bf16.mxu0 0
    %820 = vmatpush1.bf16.msra.mxu0 0
    %821 = vmatprep.subr.bf16.mxu0 0
    %822 = vmatpush1.bf16.msra.mxu0 0
    %823 = vmatprep.subr.bf16.mxu0 0
    %824 = vmatpush1.bf16.msra.mxu0 0
    %825 = vmatprep.subr.bf16.mxu0 0
    %826 = vmatpush1.bf16.msra.mxu0 0
    %827 = vmatprep.mubr.bf16.mxu0 0
    %828 = vmatmul.mubr.bf16.gmra.mrb[0].mxu0 %v723
    %v829 = vpop.f32.mrb[0].mxu0
    %v830 = vadd.f32 %v745, %v829
    %v831 = vpop.f32.mrb[0].mxu0
    %v832 = vpop.f32.mrb[0].mxu0
    %v833 = vadd.f32 %v745, %v832
    %v834 = vpop.f32.mrb[0].mxu0
    %835 = vdwg.mxu0
    %v836 = vpack.c.bf16 %v833, %v830
    %v838 = vunpack.c.l.b16 %v836
    %v839 = vunpack.c.h.b16 %v836
    %v840 = vpack.c.b16 %v838, %v838
    %v841 = vpack.c.b16 %v839, %v839
    %844 = vst [vmem:[#allocation14] sm:$0xf] %v840
    %845 = vst [vmem:[#allocation14 + $0x4] sm:$0xf] %v841
    // Predicated region
    $region82: #{tpu_custom_call.1} parent=1 // pred_check
      _
    $region83: #{tpu_custom_call.1} parent=1 // pred_check_branch
      %847 = sbr.rel (0) target = $region85
    $region84: #{tpu_custom_call.1} parent=1 // pred_region
      %s849 = ssub.s32 128, 128
      %850 = vsyncadd [#allocation4], %s849
      %s851 = sshll.u32 [#allocation14], 4
      %s852 = int_to_ptr.vmem [resolvable:$true] %s851
      %857 = dma.vmem_to_hbm [thread:$0]  %s852, 128, %s13, [#allocation4], 64, 64, 4
    $region85: #{tpu_custom_call.1} parent=1 // pred_fallthru
      _
    // Predicated region
    $region86: #{tpu_custom_call.1} parent=1 // pred_check
      _
    $region87: #{tpu_custom_call.1} parent=1 // pred_check_branch
      %859 = sbr.rel (0) target = $region89
    $region88: #{tpu_custom_call.1} parent=1 // pred_region
      %860 = dma.done [#allocation4], 128
    $region89: #{tpu_custom_call.1} parent=1 // pred_fallthru
      _
    %861 = vsyncpa [#allocation3], 1
    %862 = vsyncpa [#allocation6], 1
    %863 = vsyncpa [#allocation9], 1
    %864 = vsyncpa [#allocation12], 1
    %865 = vsyncpa [#allocation4], 1

// kernel: tpu_custom_call.1
$region0: #{tpu_custom_call.1}
  #allocation0 [shape = 'u32[]', space=smem, size = 0x4, offset = 0x4, fixed_abs, tag = 'smem constant byte address 0x4 - core index']
  #allocation1 [shape = 'u32[144,128]{1,0:T(1,128)}', space=vmem, size = 0x12000, scoped, tag = 'internal scratch']
  %s0 = inlined_call_operand.hbm [shape: bf16[16,128], index: 0, kind: input, shape index: {}]
  %s1 = inlined_call_operand.hbm [shape: bf16[128,128], index: 1, kind: input, shape index: {}]
  %s2 = inlined_call_operand.vmem [shape: f32[1,128], index: 2, kind: input, shape index: {}]
  %s3 = inlined_call_operand.hbm [shape: bf16[128,128], index: 3, kind: input, shape index: {}]
  %s4 = inlined_call_operand.vmem [shape: f32[1,128], index: 4, kind: input, shape index: {}]
  %s5 = inlined_call_operand.hbm [shape: bf16[128,128], index: 5, kind: input, shape index: {}]
  %s6 = inlined_call_operand.vmem [shape: f32[1,128], index: 6, kind: input, shape index: {}]
  %s7 = inlined_call_operand.hbm [shape: bf16[128,128], index: 7, kind: input, shape index: {}]
  %s8 = inlined_call_operand.vmem [shape: f32[1,128], index: 8, kind: input, shape index: {}]
  %s9 = inlined_call_operand.hbm [shape: bf16[128,128], index: 9, kind: input, shape index: {}]
  %s10 = inlined_call_operand.vmem [shape: f32[1,128], index: 10, kind: input, shape index: {}]
  %s11 = inlined_call_operand.hbm [shape: bf16[128,128], index: 11, kind: input, shape index: {}]
  %s12 = inlined_call_operand.vmem [shape: f32[1,128], index: 12, kind: input, shape index: {}]
  %s13 = inlined_call_operand.hbm [shape: bf16[16,128], index: 13, kind: output, shape index: {}]
  %s14 = sld [smem:[#allocation0]]
  $region90: #{tpu_custom_call.1} parent=0
    _
  %s16 = ssub.s32 1, %s14
  %s17 = scalar_select 0, %s16, %s14
  $region1: #{tpu_custom_call.1} parent=0
    #allocation2 [shape = 'u8[4096]{0}', space=vmem, size = 0x1000, scoped, tag = 'input window, operand 0, single buffered']
    #allocation3 [shape = 's32[1]{0}', space=sflag, size = 0x4, scoped, tag = 'scoped memory for tpu_custom_call.1']
    #allocation4 [shape = 's32[1]{0}', space=sflag, size = 0x4, scoped, tag = 'scoped memory for tpu_custom_call.1']
    #allocation5 [shape = 'u8[32768]{0}', space=vmem, size = 0x8000, scoped, tag = 'input window, operand 1, single buffered']
    #allocation6 [shape = 's32[1]{0}', space=sflag, size = 0x4, scoped, tag = 'scoped memory for tpu_custom_call.1']
    #allocation7 [shape = 'u8[32768]{0}', space=vmem, size = 0x8000, scoped, tag = 'input window, operand 3, single buffered']
    #allocation8 [shape = 'u8[32768]{0}', space=vmem, size = 0x8000, scoped, tag = 'input window, operand 5, single buffered']
    #allocation9 [shape = 's32[1]{0}', space=sflag, size = 0x4, scoped, tag = 'scoped memory for tpu_custom_call.1']
    #allocation10 [shape = 'u8[32768]{0}', space=vmem, size = 0x8000, scoped, tag = 'input window, operand 7, single buffered']
    #allocation11 [shape = 'u8[32768]{0}', space=vmem, size = 0x8000, scoped, tag = 'input window, operand 9, single buffered']
    #allocation12 [shape = 's32[1]{0}', space=sflag, size = 0x4, scoped, tag = 'scoped memory for tpu_custom_call.1']
    #allocation13 [shape = 'u8[32768]{0}', space=vmem, size = 0x8000, scoped, tag = 'input window, operand 11, single buffered']
    #allocation14 [shape = 'u8[4096]{0}', space=vmem, size = 0x1000, scoped, tag = 'output window, operand 0, single buffered']
    %18 = vsyncpa [#allocation3], 0
    %19 = vsyncpa [#allocation6], 0
    %20 = vsyncpa [#allocation9], 0
    %21 = vsyncpa [#allocation12], 0
    %22 = vsyncpa [#allocation4], 0
    // Predicated region
    $region2: #{tpu_custom_call.1} parent=1 // pred_check
      _
    $region3: #{tpu_custom_call.1} parent=1 // pred_check_branch
      %24 = sbr.rel (0) target = $region5
    $region4: #{tpu_custom_call.1} parent=1 // pred_region
      %s26 = ssub.s32 128, 128
      %27 = vsyncadd [#allocation3], %s26
      %s28 = sshll.u32 [#allocation2], 4
      %s29 = int_to_ptr.vmem [resolvable:$true] %s28
      %34 = dma.hbm_to_vmem [thread:$0]  %s0, 128, %s29, [#allocation3], 64, 64, 4
    $region5: #{tpu_custom_call.1} parent=1 // pred_fallthru
      _
    // Predicated region
    $region6: #{tpu_custom_call.1} parent=1 // pred_check
      _
    $region7: #{tpu_custom_call.1} parent=1 // pred_check_branch
      %36 = sbr.rel (0) target = $region9
    $region8: #{tpu_custom_call.1} parent=1 // pred_region
      %s38 = ssub.s32 1024, 1024
      %39 = vsyncadd [#allocation6], %s38
      %s40 = sshll.u32 [#allocation5], 4
      %s41 = int_to_ptr.vmem [resolvable:$true] %s40
      %46 = dma.hbm_to_vmem [thread:$0]  %s1, 1024, %s41, [#allocation6], 64, 64, 4
    $region9: #{tpu_custom_call.1} parent=1 // pred_fallthru
      _
    // Predicated region
    $region10: #{tpu_custom_call.1} parent=1 // pred_check
      _
    $region11: #{tpu_custom_call.1} parent=1 // pred_check_branch
      %48 = sbr.rel (0) target = $region13
    $region12: #{tpu_custom_call.1} parent=1 // pred_region
      _
    $region13: #{tpu_custom_call.1} parent=1 // pred_fallthru
      _
    // Predicated region
    $region14: #{tpu_custom_call.1} parent=1 // pred_check
      _
    $region15: #{tpu_custom_call.1} parent=1 // pred_check_branch
      %50 = sbr.rel (0) target = $region17
    $region16: #{tpu_custom_call.1} parent=1 // pred_region
      %s52 = ssub.s32 1024, 1024
      %53 = vsyncadd [#allocation6], %s52
      %s54 = sshll.u32 [#allocation7], 4
      %s55 = int_to_ptr.vmem [resolvable:$true] %s54
      %60 = dma.hbm_to_vmem [thread:$0]  %s3, 1024, %s55, [#allocation6], 64, 64, 4
    $region17: #{tpu_custom_call.1} parent=1 // pred_fallthru
      _
    // Predicated region
    $region18: #{tpu_custom_call.1} parent=1 // pred_check
      _
    $region19: #{tpu_custom_call.1} parent=1 // pred_check_branch
      %62 = sbr.rel (0) target = $region21
    $region20: #{tpu_custom_call.1} parent=1 // pred_region
      _
    $region21: #{tpu_custom_call.1} parent=1 // pred_fallthru
      _
    // Predicated region
    $region22: #{tpu_custom_call.1} parent=1 // pred_check
      _
    $region23: #{tpu_custom_call.1} parent=1 // pred_check_branch
      %64 = sbr.rel (0) target = $region25
    $region24: #{tpu_custom_call.1} parent=1 // pred_region
      %s66 = ssub.s32 1024, 1024
      %67 = vsyncadd [#allocation9], %s66
      %s68 = sshll.u32 [#allocation8], 4
      %s69 = int_to_ptr.vmem [resolvable:$true] %s68
      %74 = dma.hbm_to_vmem [thread:$0]  %s5, 1024, %s69, [#allocation9], 64, 64, 4
    $region25: #{tpu_custom_call.1} parent=1 // pred_fallthru
      _
    // Predicated region
    $region26: #{tpu_custom_call.1} parent=1 // pred_check
      _
    $region27: #{tpu_custom_call.1} parent=1 // pred_check_branch
      %76 = sbr.rel (0) target = $region29
    $region28: #{tpu_custom_call.1} parent=1 // pred_region
      _
    $region29: #{tpu_custom_call.1} parent=1 // pred_fallthru
      _
    // Predicated region
    $region30: #{tpu_custom_call.1} parent=1 // pred_check
      _
    $region31: #{tpu_custom_call.1} parent=1 // pred_check_branch
      %78 = sbr.rel (0) target = $region33
    $region32: #{tpu_custom_call.1} parent=1 // pred_region
      %s80 = ssub.s32 1024, 1024
      %81 = vsyncadd [#allocation9], %s80
      %s82 = sshll.u32 [#allocation10], 4
      %s83 = int_to_ptr.vmem [resolvable:$true] %s82
      %88 = dma.hbm_to_vmem [thread:$0]  %s7, 1024, %s83, [#allocation9], 64, 64, 4
    $region33: #{tpu_custom_call.1} parent=1 // pred_fallthru
      _
    // Predicated region
    $region34: #{tpu_custom_call.1} parent=1 // pred_check
      _
    $region35: #{tpu_custom_call.1} parent=1 // pred_check_branch
      %90 = sbr.rel (0) target = $region37
    $region36: #{tpu_custom_call.1} parent=1 // pred_region
      _
    $region37: #{tpu_custom_call.1} parent=1 // pred_fallthru
      _
    // Predicated region
    $region38: #{tpu_custom_call.1} parent=1 // pred_check
      _
    $region39: #{tpu_custom_call.1} parent=1 // pred_check_branch
      %92 = sbr.rel (0) target = $region41
    $region40: #{tpu_custom_call.1} parent=1 // pred_region
      %s94 = ssub.s32 1024, 1024
      %95 = vsyncadd [#allocation12], %s94
      %s96 = sshll.u32 [#allocation11], 4
      %s97 = int_to_ptr.vmem [resolvable:$true] %s96
      %102 = dma.hbm_to_vmem [thread:$0]  %s9, 1024, %s97, [#allocation12], 64, 64, 4
    $region41: #{tpu_custom_call.1} parent=1 // pred_fallthru
      _
    // Predicated region
    $region42: #{tpu_custom_call.1} parent=1 // pred_check
      _
    $region43: #{tpu_custom_call.1} parent=1 // pred_check_branch
      %104 = sbr.rel (0) target = $region45
    $region44: #{tpu_custom_call.1} parent=1 // pred_region
      _
    $region45: #{tpu_custom_call.1} parent=1 // pred_fallthru
      _
    // Predicated region
    $region46: #{tpu_custom_call.1} parent=1 // pred_check
      _
    $region47: #{tpu_custom_call.1} parent=1 // pred_check_branch
      %106 = sbr.rel (0) target = $region49
    $region48: #{tpu_custom_call.1} parent=1 // pred_region
      %s108 = ssub.s32 1024, 1024
      %109 = vsyncadd [#allocation12], %s108
      %s110 = sshll.u32 [#allocation13], 4
      %s111 = int_to_ptr.vmem [resolvable:$true] %s110
      %116 = dma.hbm_to_vmem [thread:$0]  %s11, 1024, %s111, [#allocation12], 64, 64, 4
    $region49: #{tpu_custom_call.1} parent=1 // pred_fallthru
      _
    // Predicated region
    $region50: #{tpu_custom_call.1} parent=1 // pred_check
      _
    $region51: #{tpu_custom_call.1} parent=1 // pred_check_branch
      %118 = sbr.rel (0) target = $region53
    $region52: #{tpu_custom_call.1} parent=1 // pred_region
      _
    $region53: #{tpu_custom_call.1} parent=1 // pred_fallthru
      _
    // Predicated region
    $region54: #{tpu_custom_call.1} parent=1 // pred_check
      _
    $region55: #{tpu_custom_call.1} parent=1 // pred_check_branch
      %120 = sbr.rel (0) target = $region57
    $region56: #{tpu_custom_call.1} parent=1 // pred_region
      %121 = dma.done [#allocation3], 128
    $region57: #{tpu_custom_call.1} parent=1 // pred_fallthru
      _
    // Predicated region
    $region58: #{tpu_custom_call.1} parent=1 // pred_check
      _
    $region59: #{tpu_custom_call.1} parent=1 // pred_check_branch
      %123 = sbr.rel (0) target = $region61
    $region60: #{tpu_custom_call.1} parent=1 // pred_region
      %124 = dma.done [#allocation6], 1024
    $region61: #{tpu_custom_call.1} parent=1 // pred_fallthru
      _
    // Predicated region
    $region62: #{tpu_custom_call.1} parent=1 // pred_check
      _
    $region63: #{tpu_custom_call.1} parent=1 // pred_check_branch
      %126 = sbr.rel (0) target = $region65
    $region64: #{tpu_custom_call.1} parent=1 // pred_region
      %127 = dma.done [#allocation6], 1024
    $region65: #{tpu_custom_call.1} parent=1 // pred_fallthru
      _
    // Predicated region
    $region66: #{tpu_custom_call.1} parent=1 // pred_check
      _
    $region67: #{tpu_custom_call.1} parent=1 // pred_check_branch
      %129 = sbr.rel (0) target = $region69
    $region68: #{tpu_custom_call.1} parent=1 // pred_region
      %130 = dma.done [#allocation9], 1024
    $region69: #{tpu_custom_call.1} parent=1 // pred_fallthru
      _
    // Predicated region
    $region70: #{tpu_custom_call.1} parent=1 // pred_check
      _
    $region71: #{tpu_custom_call.1} parent=1 // pred_check_branch
      %132 = sbr.rel (0) target = $region73
    $region72: #{tpu_custom_call.1} parent=1 // pred_region
      %133 = dma.done [#allocation9], 1024
    $region73: #{tpu_custom_call.1} parent=1 // pred_fallthru
      _
    // Predicated region
    $region74: #{tpu_custom_call.1} parent=1 // pred_check
      _
    $region75: #{tpu_custom_call.1} parent=1 // pred_check_branch
      %135 = sbr.rel (0) target = $region77
    $region76: #{tpu_custom_call.1} parent=1 // pred_region
      %136 = dma.done [#allocation12], 1024
    $region77: #{tpu_custom_call.1} parent=1 // pred_fallthru
      _
    // Predicated region
    $region78: #{tpu_custom_call.1} parent=1 // pred_check
      _
    $region79: #{tpu_custom_call.1} parent=1 // pred_check_branch
      %138 = sbr.rel (0) target = $region81
    $region80: #{tpu_custom_call.1} parent=1 // pred_region
      %139 = dma.done [#allocation12], 1024
    $region81: #{tpu_custom_call.1} parent=1 // pred_fallthru
      _
    %v141 = vld [vmem:[#allocation2] sm:$0xf]
    %v142 = vld [vmem:[#allocation2 + $0x4] sm:$0xf]
    %v143 = vld [vmem:[#allocation5] sm:$0xf]
    %v144 = vld [vmem:[#allocation5 + $0x4] sm:$0xf]
    %v145 = vld [vmem:[#allocation5 + $0x8] sm:$0xf]
    %v146 = vld [vmem:[#allocation5 + $0xc] sm:$0xf]
    %v147 = vld [vmem:[#allocation5 + $0x10] sm:$0xf]
    %v148 = vld [vmem:[#allocation5 + $0x14] sm:$0xf]
    %v149 = vld [vmem:[#allocation5 + $0x18] sm:$0xf]
    %v150 = vld [vmem:[#allocation5 + $0x1c] sm:$0xf]
    %v151 = vld [vmem:[#allocation5 + $0x20] sm:$0xf]
    %v152 = vld [vmem:[#allocation5 + $0x24] sm:$0xf]
    %v153 = vld [vmem:[#allocation5 + $0x28] sm:$0xf]
    %v154 = vld [vmem:[#allocation5 + $0x2c] sm:$0xf]
    %v155 = vld [vmem:[#allocation5 + $0x30] sm:$0xf]
    %v156 = vld [vmem:[#allocation5 + $0x34] sm:$0xf]
    %v157 = vld [vmem:[#allocation5 + $0x38] sm:$0xf]
    %v158 = vld [vmem:[#allocation5 + $0x3c] sm:$0xf]
    %v159 = vld [vmem:[%s2] sm:$0x1]
    %v161 = vlaneseq
    %v162 = vshrl.u32 %v161, 7
    %v163 = vsub.s32 0, %v162
    %v164 = vrot.slane %v159, %v163
    %v168 = vunpack.c.l.b16 %v141
    %v169 = vunpack.c.l.b16 %v142
    %v170 = vpack.c.b16 %v169, %v168
    %v188 = vunpack.c.l.b16 %v143
    %v189 = vunpack.c.l.b16 %v144
    %v190 = vunpack.c.l.b16 %v145
    %v191 = vunpack.c.l.b16 %v146
    %v192 = vunpack.c.l.b16 %v147
    %v193 = vunpack.c.l.b16 %v148
    %v194 = vunpack.c.l.b16 %v149
    %v195 = vunpack.c.l.b16 %v150
    %v196 = vunpack.c.l.b16 %v151
    %v197 = vunpack.c.l.b16 %v152
    %v198 = vunpack.c.l.b16 %v153
    %v199 = vunpack.c.l.b16 %v154
    %v200 = vunpack.c.l.b16 %v155
    %v201 = vunpack.c.l.b16 %v156
    %v202 = vunpack.c.l.b16 %v157
    %v203 = vunpack.c.l.b16 %v158
    %v204 = vpack.c.b16 %v189, %v188
    %v205 = vpack.c.b16 %v191, %v190
    %v206 = vpack.c.b16 %v193, %v192
    %v207 = vpack.c.b16 %v195, %v194
    %v208 = vpack.c.b16 %v197, %v196
    %v209 = vpack.c.b16 %v199, %v198
    %v210 = vpack.c.b16 %v201, %v200
    %v211 = vpack.c.b16 %v203, %v202
    %220 = vmatprep.subr.bf16.mxu0 0
    %221 = vmatpush1.bf16.msra.mxu0 %v204
    %222 = vmatprep.subr.bf16.mxu0 0
    %223 = vmatpush1.bf16.msra.mxu0 %v205
    %224 = vmatprep.subr.bf16.mxu0 0
    %225 = vmatpush1.bf16.msra.mxu0 %v206
    %226 = vmatprep.subr.bf16.mxu0 0
    %227 = vmatpush1.bf16.msra.mxu0 %v207
    %228 = vmatprep.subr.bf16.mxu0 0
    %229 = vmatpush1.bf16.msra.mxu0 %v208
    %230 = vmatprep.subr.bf16.mxu0 0
    %231 = vmatpush1.bf16.msra.mxu0 %v209
    %232 = vmatprep.subr.bf16.mxu0 0
    %233 = vmatpush1.bf16.msra.mxu0 %v210
    %234 = vmatprep.subr.bf16.mxu0 0
    %235 = vmatpush1.bf16.msra.mxu0 %v211
    %236 = vmatprep.subr.bf16.mxu0 0
    %237 = vmatpush1.bf16.msra.mxu0 0
    %238 = vmatprep.subr.bf16.mxu0 0
    %239 = vmatpush1.bf16.msra.mxu0 0
    %240 = vmatprep.subr.bf16.mxu0 0
    %241 = vmatpush1.bf16.msra.mxu0 0
    %242 = vmatprep.subr.bf16.mxu0 0
    %243 = vmatpush1.bf16.msra.mxu0 0
    %244 = vmatprep.subr.bf16.mxu0 0
    %245 = vmatpush1.bf16.msra.mxu0 0
    %246 = vmatprep.subr.bf16.mxu0 0
    %247 = vmatpush1.bf16.msra.mxu0 0
    %248 = vmatprep.subr.bf16.mxu0 0
    %249 = vmatpush1.bf16.msra.mxu0 0
    %250 = vmatprep.subr.bf16.mxu0 0
    %251 = vmatpush1.bf16.msra.mxu0 0
    %252 = vmatprep.mubr.bf16.mxu0 0
    %253 = vmatmul.mubr.bf16.gmra.mrb[0].mxu0 %v170
    %v254 = vpop.f32.mrb[0].mxu0
    %v255 = vadd.f32 %v164, %v254
    %v256 = vpop.f32.mrb[0].mxu0
    %v257 = vpop.f32.mrb[0].mxu0
    %v258 = vadd.f32 %v164, %v257
    %v259 = vpop.f32.mrb[0].mxu0
    %260 = vdwg.mxu0
    %v261 = vmax.f32 %v255, 0.0
    %v262 = vmax.f32 %v258, 0.0
    %v263 = vpack.c.bf16 %v262, %v261
    %v264 = vld [vmem:[#allocation7] sm:$0xf]
    %v265 = vld [vmem:[#allocation7 + $0x4] sm:$0xf]
    %v266 = vld [vmem:[#allocation7 + $0x8] sm:$0xf]
    %v267 = vld [vmem:[#allocation7 + $0xc] sm:$0xf]
    %v268 = vld [vmem:[#allocation7 + $0x10] sm:$0xf]
    %v269 = vld [vmem:[#allocation7 + $0x14] sm:$0xf]
    %v270 = vld [vmem:[#allocation7 + $0x18] sm:$0xf]
    %v271 = vld [vmem:[#allocation7 + $0x1c] sm:$0xf]
    %v272 = vld [vmem:[#allocation7 + $0x20] sm:$0xf]
    %v273 = vld [vmem:[#allocation7 + $0x24] sm:$0xf]
    %v274 = vld [vmem:[#allocation7 + $0x28] sm:$0xf]
    %v275 = vld [vmem:[#allocation7 + $0x2c] sm:$0xf]
    %v276 = vld [vmem:[#allocation7 + $0x30] sm:$0xf]
    %v277 = vld [vmem:[#allocation7 + $0x34] sm:$0xf]
    %v278 = vld [vmem:[#allocation7 + $0x38] sm:$0xf]
    %v279 = vld [vmem:[#allocation7 + $0x3c] sm:$0xf]
    %v280 = vld [vmem:[%s4] sm:$0x1]
    %v282 = vlaneseq
    %v283 = vshrl.u32 %v282, 7
    %v284 = vsub.s32 0, %v283
    %v285 = vrot.slane %v280, %v284
    %v303 = vunpack.c.l.b16 %v264
    %v304 = vunpack.c.l.b16 %v265
    %v305 = vunpack.c.l.b16 %v266
    %v306 = vunpack.c.l.b16 %v267
    %v307 = vunpack.c.l.b16 %v268
    %v308 = vunpack.c.l.b16 %v269
    %v309 = vunpack.c.l.b16 %v270
    %v310 = vunpack.c.l.b16 %v271
    %v311 = vunpack.c.l.b16 %v272
    %v312 = vunpack.c.l.b16 %v273
    %v313 = vunpack.c.l.b16 %v274
    %v314 = vunpack.c.l.b16 %v275
    %v315 = vunpack.c.l.b16 %v276
    %v316 = vunpack.c.l.b16 %v277
    %v317 = vunpack.c.l.b16 %v278
    %v318 = vunpack.c.l.b16 %v279
    %v319 = vpack.c.b16 %v304, %v303
    %v320 = vpack.c.b16 %v306, %v305
    %v321 = vpack.c.b16 %v308, %v307
    %v322 = vpack.c.b16 %v310, %v309
    %v323 = vpack.c.b16 %v312, %v311
    %v324 = vpack.c.b16 %v314, %v313
    %v325 = vpack.c.b16 %v316, %v315
    %v326 = vpack.c.b16 %v318, %v317
    %335 = vmatprep.subr.bf16.mxu0 0
    %336 = vmatpush1.bf16.msra.mxu0 %v319
    %337 = vmatprep.subr.bf16.mxu0 0
    %338 = vmatpush1.bf16.msra.mxu0 %v320
    %339 = vmatprep.subr.bf16.mxu0 0
    %340 = vmatpush1.bf16.msra.mxu0 %v321
    %341 = vmatprep.subr.bf16.mxu0 0
    %342 = vmatpush1.bf16.msra.mxu0 %v322
    %343 = vmatprep.subr.bf16.mxu0 0
    %344 = vmatpush1.bf16.msra.mxu0 %v323
    %345 = vmatprep.subr.bf16.mxu0 0
    %346 = vmatpush1.bf16.msra.mxu0 %v324
    %347 = vmatprep.subr.bf16.mxu0 0
    %348 = vmatpush1.bf16.msra.mxu0 %v325
    %349 = vmatprep.subr.bf16.mxu0 0
    %350 = vmatpush1.bf16.msra.mxu0 %v326
    %351 = vmatprep.subr.bf16.mxu0 0
    %352 = vmatpush1.bf16.msra.mxu0 0
    %353 = vmatprep.subr.bf16.mxu0 0
    %354 = vmatpush1.bf16.msra.mxu0 0
    %355 = vmatprep.subr.bf16.mxu0 0
    %356 = vmatpush1.bf16.msra.mxu0 0
    %357 = vmatprep.subr.bf16.mxu0 0
    %358 = vmatpush1.bf16.msra.mxu0 0
    %359 = vmatprep.subr.bf16.mxu0 0
    %360 = vmatpush1.bf16.msra.mxu0 0
    %361 = vmatprep.subr.bf16.mxu0 0
    %362 = vmatpush1.bf16.msra.mxu0 0
    %363 = vmatprep.subr.bf16.mxu0 0
    %364 = vmatpush1.bf16.msra.mxu0 0
    %365 = vmatprep.subr.bf16.mxu0 0
    %366 = vmatpush1.bf16.msra.mxu0 0
    %367 = vmatprep.mubr.bf16.mxu0 0
    %368 = vmatmul.mubr.bf16.gmra.mrb[0].mxu0 %v263
    %v369 = vpop.f32.mrb[0].mxu0
    %v370 = vadd.f32 %v285, %v369
    %v371 = vpop.f32.mrb[0].mxu0
    %v372 = vpop.f32.mrb[0].mxu0
    %v373 = vadd.f32 %v285, %v372
    %v374 = vpop.f32.mrb[0].mxu0
    %375 = vdwg.mxu0
    %v376 = vmax.f32 %v370, 0.0
    %v377 = vmax.f32 %v373, 0.0
    %v378 = vpack.c.bf16 %v377, %v376
    %v379 = vld [vmem:[#allocation8] sm:$0xf]
    %v380 = vld [vmem:[#allocation8 + $0x4] sm:$0xf]
    %v381 = vld [vmem:[#allocation8 + $0x8] sm:$0xf]
    %v382 = vld [vmem:[#allocation8 + $0xc] sm:$0xf]
    %v383 = vld [vmem:[#allocation8 + $0x10] sm:$0xf]
    %v384 = vld [vmem:[#allocation8 + $0x14] sm:$0xf]
    %v385 = vld [vmem:[#allocation8 + $0x18] sm:$0xf]
    %v386 = vld [vmem:[#allocation8 + $0x1c] sm:$0xf]
    %v387 = vld [vmem:[#allocation8 + $0x20] sm:$0xf]
    %v388 = vld [vmem:[#allocation8 + $0x24] sm:$0xf]
    %v389 = vld [vmem:[#allocation8 + $0x28] sm:$0xf]
    %v390 = vld [vmem:[#allocation8 + $0x2c] sm:$0xf]
    %v391 = vld [vmem:[#allocation8 + $0x30] sm:$0xf]
    %v392 = vld [vmem:[#allocation8 + $0x34] sm:$0xf]
    %v393 = vld [vmem:[#allocation8 + $0x38] sm:$0xf]
    %v394 = vld [vmem:[#allocation8 + $0x3c] sm:$0xf]
    %v395 = vld [vmem:[%s6] sm:$0x1]
    %v397 = vlaneseq
    %v398 = vshrl.u32 %v397, 7
    %v399 = vsub.s32 0, %v398
    %v400 = vrot.slane %v395, %v399
    %v418 = vunpack.c.l.b16 %v379
    %v419 = vunpack.c.l.b16 %v380
    %v420 = vunpack.c.l.b16 %v381
    %v421 = vunpack.c.l.b16 %v382
    %v422 = vunpack.c.l.b16 %v383
    %v423 = vunpack.c.l.b16 %v384
    %v424 = vunpack.c.l.b16 %v385
    %v425 = vunpack.c.l.b16 %v386
    %v426 = vunpack.c.l.b16 %v387
    %v427 = vunpack.c.l.b16 %v388
    %v428 = vunpack.c.l.b16 %v389
    %v429 = vunpack.c.l.b16 %v390
    %v430 = vunpack.c.l.b16 %v391
    %v431 = vunpack.c.l.b16 %v392
    %v432 = vunpack.c.l.b16 %v393
    %v433 = vunpack.c.l.b16 %v394
    %v434 = vpack.c.b16 %v419, %v418
    %v435 = vpack.c.b16 %v421, %v420
    %v436 = vpack.c.b16 %v423, %v422
    %v437 = vpack.c.b16 %v425, %v424
    %v438 = vpack.c.b16 %v427, %v426
    %v439 = vpack.c.b16 %v429, %v428
    %v440 = vpack.c.b16 %v431, %v430
    %v441 = vpack.c.b16 %v433, %v432
    %450 = vmatprep.subr.bf16.mxu0 0
    %451 = vmatpush1.bf16.msra.mxu0 %v434
    %452 = vmatprep.subr.bf16.mxu0 0
    %453 = vmatpush1.bf16.msra.mxu0 %v435
    %454 = vmatprep.subr.bf16.mxu0 0
    %455 = vmatpush1.bf16.msra.mxu0 %v436
    %456 = vmatprep.subr.bf16.mxu0 0
    %457 = vmatpush1.bf16.msra.mxu0 %v437
    %458 = vmatprep.subr.bf16.mxu0 0
    %459 = vmatpush1.bf16.msra.mxu0 %v438
    %460 = vmatprep.subr.bf16.mxu0 0
    %461 = vmatpush1.bf16.msra.mxu0 %v439
    %462 = vmatprep.subr.bf16.mxu0 0
    %463 = vmatpush1.bf16.msra.mxu0 %v440
    %464 = vmatprep.subr.bf16.mxu0 0
    %465 = vmatpush1.bf16.msra.mxu0 %v441
    %466 = vmatprep.subr.bf16.mxu0 0
    %467 = vmatpush1.bf16.msra.mxu0 0
    %468 = vmatprep.subr.bf16.mxu0 0
    %469 = vmatpush1.bf16.msra.mxu0 0
    %470 = vmatprep.subr.bf16.mxu0 0
    %471 = vmatpush1.bf16.msra.mxu0 0
    %472 = vmatprep.subr.bf16.mxu0 0
    %473 = vmatpush1.bf16.msra.mxu0 0
    %474 = vmatprep.subr.bf16.mxu0 0
    %475 = vmatpush1.bf16.msra.mxu0 0
    %476 = vmatprep.subr.bf16.mxu0 0
    %477 = vmatpush1.bf16.msra.mxu0 0
    %478 = vmatprep.subr.bf16.mxu0 0
    %479 = vmatpush1.bf16.msra.mxu0 0
    %480 = vmatprep.subr.bf16.mxu0 0
    %481 = vmatpush1.bf16.msra.mxu0 0
    %482 = vmatprep.mubr.bf16.mxu0 0
    %483 = vmatmul.mubr.bf16.gmra.mrb[0].mxu0 %v378
    %v484 = vpop.f32.mrb[0].mxu0
    %v485 = vadd.f32 %v400, %v484
    %v486 = vpop.f32.mrb[0].mxu0
    %v487 = vpop.f32.mrb[0].mxu0
    %v488 = vadd.f32 %v400, %v487
    %v489 = vpop.f32.mrb[0].mxu0
    %490 = vdwg.mxu0
    %v491 = vmax.f32 %v485, 0.0
    %v492 = vmax.f32 %v488, 0.0
    %v493 = vpack.c.bf16 %v492, %v491
    %v494 = vld [vmem:[#allocation10] sm:$0xf]
    %v495 = vld [vmem:[#allocation10 + $0x4] sm:$0xf]
    %v496 = vld [vmem:[#allocation10 + $0x8] sm:$0xf]
    %v497 = vld [vmem:[#allocation10 + $0xc] sm:$0xf]
    %v498 = vld [vmem:[#allocation10 + $0x10] sm:$0xf]
    %v499 = vld [vmem:[#allocation10 + $0x14] sm:$0xf]
    %v500 = vld [vmem:[#allocation10 + $0x18] sm:$0xf]
    %v501 = vld [vmem:[#allocation10 + $0x1c] sm:$0xf]
    %v502 = vld [vmem:[#allocation10 + $0x20] sm:$0xf]
    %v503 = vld [vmem:[#allocation10 + $0x24] sm:$0xf]
    %v504 = vld [vmem:[#allocation10 + $0x28] sm:$0xf]
    %v505 = vld [vmem:[#allocation10 + $0x2c] sm:$0xf]
    %v506 = vld [vmem:[#allocation10 + $0x30] sm:$0xf]
    %v507 = vld [vmem:[#allocation10 + $0x34] sm:$0xf]
    %v508 = vld [vmem:[#allocation10 + $0x38] sm:$0xf]
    %v509 = vld [vmem:[#allocation10 + $0x3c] sm:$0xf]
    %v510 = vld [vmem:[%s8] sm:$0x1]
    %v512 = vlaneseq
    %v513 = vshrl.u32 %v512, 7
    %v514 = vsub.s32 0, %v513
    %v515 = vrot.slane %v510, %v514
    %v533 = vunpack.c.l.b16 %v494
    %v534 = vunpack.c.l.b16 %v495
    %v535 = vunpack.c.l.b16 %v496
    %v536 = vunpack.c.l.b16 %v497
    %v537 = vunpack.c.l.b16 %v498
    %v538 = vunpack.c.l.b16 %v499
    %v539 = vunpack.c.l.b16 %v500
    %v540 = vunpack.c.l.b16 %v501
    %v541 = vunpack.c.l.b16 %v502
    %v542 = vunpack.c.l.b16 %v503
    %v543 = vunpack.c.l.b16 %v504
    %v544 = vunpack.c.l.b16 %v505
    %v545 = vunpack.c.l.b16 %v506
    %v546 = vunpack.c.l.b16 %v507
    %v547 = vunpack.c.l.b16 %v508
    %v548 = vunpack.c.l.b16 %v509
    %v549 = vpack.c.b16 %v534, %v533
    %v550 = vpack.c.b16 %v536, %v535
    %v551 = vpack.c.b16 %v538, %v537
    %v552 = vpack.c.b16 %v540, %v539
    %v553 = vpack.c.b16 %v542, %v541
    %v554 = vpack.c.b16 %v544, %v543
    %v555 = vpack.c.b16 %v546, %v545
    %v556 = vpack.c.b16 %v548, %v547
    %565 = vmatprep.subr.bf16.mxu0 0
    %566 = vmatpush1.bf16.msra.mxu0 %v549
    %567 = vmatprep.subr.bf16.mxu0 0
    %568 = vmatpush1.bf16.msra.mxu0 %v550
    %569 = vmatprep.subr.bf16.mxu0 0
    %570 = vmatpush1.bf16.msra.mxu0 %v551
    %571 = vmatprep.subr.bf16.mxu0 0
    %572 = vmatpush1.bf16.msra.mxu0 %v552
    %573 = vmatprep.subr.bf16.mxu0 0
    %574 = vmatpush1.bf16.msra.mxu0 %v553
    %575 = vmatprep.subr.bf16.mxu0 0
    %576 = vmatpush1.bf16.msra.mxu0 %v554
    %577 = vmatprep.subr.bf16.mxu0 0
    %578 = vmatpush1.bf16.msra.mxu0 %v555
    %579 = vmatprep.subr.bf16.mxu0 0
    %580 = vmatpush1.bf16.msra.mxu0 %v556
    %581 = vmatprep.subr.bf16.mxu0 0
    %582 = vmatpush1.bf16.msra.mxu0 0
    %583 = vmatprep.subr.bf16.mxu0 0
    %584 = vmatpush1.bf16.msra.mxu0 0
    %585 = vmatprep.subr.bf16.mxu0 0
    %586 = vmatpush1.bf16.msra.mxu0 0
    %587 = vmatprep.subr.bf16.mxu0 0
    %588 = vmatpush1.bf16.msra.mxu0 0
    %589 = vmatprep.subr.bf16.mxu0 0
    %590 = vmatpush1.bf16.msra.mxu0 0
    %591 = vmatprep.subr.bf16.mxu0 0
    %592 = vmatpush1.bf16.msra.mxu0 0
    %593 = vmatprep.subr.bf16.mxu0 0
    %594 = vmatpush1.bf16.msra.mxu0 0
    %595 = vmatprep.subr.bf16.mxu0 0
    %596 = vmatpush1.bf16.msra.mxu0 0
    %597 = vmatprep.mubr.bf16.mxu0 0
    %598 = vmatmul.mubr.bf16.gmra.mrb[0].mxu0 %v493
    %v599 = vpop.f32.mrb[0].mxu0
    %v600 = vadd.f32 %v515, %v599
    %v601 = vpop.f32.mrb[0].mxu0
    %v602 = vpop.f32.mrb[0].mxu0
    %v603 = vadd.f32 %v515, %v602
    %v604 = vpop.f32.mrb[0].mxu0
    %605 = vdwg.mxu0
    %v606 = vmax.f32 %v600, 0.0
    %v607 = vmax.f32 %v603, 0.0
    %v608 = vpack.c.bf16 %v607, %v606
    %v609 = vld [vmem:[#allocation11] sm:$0xf]
    %v610 = vld [vmem:[#allocation11 + $0x4] sm:$0xf]
    %v611 = vld [vmem:[#allocation11 + $0x8] sm:$0xf]
    %v612 = vld [vmem:[#allocation11 + $0xc] sm:$0xf]
    %v613 = vld [vmem:[#allocation11 + $0x10] sm:$0xf]
    %v614 = vld [vmem:[#allocation11 + $0x14] sm:$0xf]
    %v615 = vld [vmem:[#allocation11 + $0x18] sm:$0xf]
    %v616 = vld [vmem:[#allocation11 + $0x1c] sm:$0xf]
    %v617 = vld [vmem:[#allocation11 + $0x20] sm:$0xf]
    %v618 = vld [vmem:[#allocation11 + $0x24] sm:$0xf]
    %v619 = vld [vmem:[#allocation11 + $0x28] sm:$0xf]
    %v620 = vld [vmem:[#allocation11 + $0x2c] sm:$0xf]
    %v621 = vld [vmem:[#allocation11 + $0x30] sm:$0xf]
    %v622 = vld [vmem:[#allocation11 + $0x34] sm:$0xf]
    %v623 = vld [vmem:[#allocation11 + $0x38] sm:$0xf]
    %v624 = vld [vmem:[#allocation11 + $0x3c] sm:$0xf]
    %v625 = vld [vmem:[%s10] sm:$0x1]
    %v627 = vlaneseq
    %v628 = vshrl.u32 %v627, 7
    %v629 = vsub.s32 0, %v628
    %v630 = vrot.slane %v625, %v629
    %v648 = vunpack.c.l.b16 %v609
    %v649 = vunpack.c.l.b16 %v610
    %v650 = vunpack.c.l.b16 %v611
    %v651 = vunpack.c.l.b16 %v612
    %v652 = vunpack.c.l.b16 %v613
    %v653 = vunpack.c.l.b16 %v614
    %v654 = vunpack.c.l.b16 %v615
    %v655 = vunpack.c.l.b16 %v616
    %v656 = vunpack.c.l.b16 %v617
    %v657 = vunpack.c.l.b16 %v618
    %v658 = vunpack.c.l.b16 %v619
    %v659 = vunpack.c.l.b16 %v620
    %v660 = vunpack.c.l.b16 %v621
    %v661 = vunpack.c.l.b16 %v622
    %v662 = vunpack.c.l.b16 %v623
    %v663 = vunpack.c.l.b16 %v624
    %v664 = vpack.c.b16 %v649, %v648
    %v665 = vpack.c.b16 %v651, %v650
    %v666 = vpack.c.b16 %v653, %v652
    %v667 = vpack.c.b16 %v655, %v654
    %v668 = vpack.c.b16 %v657, %v656
    %v669 = vpack.c.b16 %v659, %v658
    %v670 = vpack.c.b16 %v661, %v660
    %v671 = vpack.c.b16 %v663, %v662
    %680 = vmatprep.subr.bf16.mxu0 0
    %681 = vmatpush1.bf16.msra.mxu0 %v664
    %682 = vmatprep.subr.bf16.mxu0 0
    %683 = vmatpush1.bf16.msra.mxu0 %v665
    %684 = vmatprep.subr.bf16.mxu0 0
    %685 = vmatpush1.bf16.msra.mxu0 %v666
    %686 = vmatprep.subr.bf16.mxu0 0
    %687 = vmatpush1.bf16.msra.mxu0 %v667
    %688 = vmatprep.subr.bf16.mxu0 0
    %689 = vmatpush1.bf16.msra.mxu0 %v668
    %690 = vmatprep.subr.bf16.mxu0 0
    %691 = vmatpush1.bf16.msra.mxu0 %v669
    %692 = vmatprep.subr.bf16.mxu0 0
    %693 = vmatpush1.bf16.msra.mxu0 %v670
    %694 = vmatprep.subr.bf16.mxu0 0
    %695 = vmatpush1.bf16.msra.mxu0 %v671
    %696 = vmatprep.subr.bf16.mxu0 0
    %697 = vmatpush1.bf16.msra.mxu0 0
    %698 = vmatprep.subr.bf16.mxu0 0
    %699 = vmatpush1.bf16.msra.mxu0 0
    %700 = vmatprep.subr.bf16.mxu0 0
    %701 = vmatpush1.bf16.msra.mxu0 0
    %702 = vmatprep.subr.bf16.mxu0 0
    %703 = vmatpush1.bf16.msra.mxu0 0
    %704 = vmatprep.subr.bf16.mxu0 0
    %705 = vmatpush1.bf16.msra.mxu0 0
    %706 = vmatprep.subr.bf16.mxu0 0
    %707 = vmatpush1.bf16.msra.mxu0 0
    %708 = vmatprep.subr.bf16.mxu0 0
    %709 = vmatpush1.bf16.msra.mxu0 0
    %710 = vmatprep.subr.bf16.mxu0 0
    %711 = vmatpush1.bf16.msra.mxu0 0
    %712 = vmatprep.mubr.bf16.mxu0 0
    %713 = vmatmul.mubr.bf16.gmra.mrb[0].mxu0 %v608
    %v714 = vpop.f32.mrb[0].mxu0
    %v715 = vadd.f32 %v630, %v714
    %v716 = vpop.f32.mrb[0].mxu0
    %v717 = vpop.f32.mrb[0].mxu0
    %v718 = vadd.f32 %v630, %v717
    %v719 = vpop.f32.mrb[0].mxu0
    %720 = vdwg.mxu0
    %v721 = vmax.f32 %v715, 0.0
    %v722 = vmax.f32 %v718, 0.0
    %v723 = vpack.c.bf16 %v722, %v721
    %v724 = vld [vmem:[#allocation13] sm:$0xf]
    %v725 = vld [vmem:[#allocation13 + $0x4] sm:$0xf]
    %v726 = vld [vmem:[#allocation13 + $0x8] sm:$0xf]
    %v727 = vld [vmem:[#allocation13 + $0xc] sm:$0xf]
    %v728 = vld [vmem:[#allocation13 + $0x10] sm:$0xf]
    %v729 = vld [vmem:[#allocation13 + $0x14] sm:$0xf]
    %v730 = vld [vmem:[#allocation13 + $0x18] sm:$0xf]
    %v731 = vld [vmem:[#allocation13 + $0x1c] sm:$0xf]
    %v732 = vld [vmem:[#allocation13 + $0x20] sm:$0xf]
    %v733 = vld [vmem:[#allocation13 + $0x24] sm:$0xf]
    %v734 = vld [vmem:[#allocation13 + $0x28] sm:$0xf]
    %v735 = vld [vmem:[#allocation13 + $0x2c] sm:$0xf]
    %v736 = vld [vmem:[#allocation13 + $0x30] sm:$0xf]
    %v737 = vld [vmem:[#allocation13 + $0x34] sm:$0xf]
    %v738 = vld [vmem:[#allocation13 + $0x38] sm:$0xf]
    %v739 = vld [vmem:[#allocation13 + $0x3c] sm:$0xf]
    %v740 = vld [vmem:[%s12] sm:$0x1]
    %v742 = vlaneseq
    %v743 = vshrl.u32 %v742, 7
    %v744 = vsub.s32 0, %v743
    %v745 = vrot.slane %v740, %v744
    %v763 = vunpack.c.l.b16 %v724
    %v764 = vunpack.c.l.b16 %v725
    %v765 = vunpack.c.l.b16 %v726
    %v766 = vunpack.c.l.b16 %v727
    %v767 = vunpack.c.l.b16 %v728
    %v768 = vunpack.c.l.b16 %v729
    %v769 = vunpack.c.l.b16 %v730
    %v770 = vunpack.c.l.b16 %v731
    %v771 = vunpack.c.l.b16 %v732
    %v772 = vunpack.c.l.b16 %v733
    %v773 = vunpack.c.l.b16 %v734
    %v774 = vunpack.c.l.b16 %v735
    %v775 = vunpack.c.l.b16 %v736
    %v776 = vunpack.c.l.b16 %v737
    %v777 = vunpack.c.l.b16 %v738
    %v778 = vunpack.c.l.b16 %v739
    %v779 = vpack.c.b16 %v764, %v763
    %v780 = vpack.c.b16 %v766, %v765
    %v781 = vpack.c.b16 %v768, %v767
    %v782 = vpack.c.b16 %v770, %v769
    %v783 = vpack.c.b16 %v772, %v771
    %v784 = vpack.c.b16 %v774, %v773
    %v785 = vpack.c.b16 %v776, %v775
    %v786 = vpack.c.b16 %v778, %v777
    %795 = vmatprep.subr.bf16.mxu0 0
    %796 = vmatpush1.bf16.msra.mxu0 %v779
    %797 = vmatprep.subr.bf16.mxu0 0
    %798 = vmatpush1.bf16.msra.mxu0 %v780
    %799 = vmatprep.subr.bf16.mxu0 0
    %800 = vmatpush1.bf16.msra.mxu0 %v781
    %801 = vmatprep.subr.bf16.mxu0 0
    %802 = vmatpush1.bf16.msra.mxu0 %v782
    %803 = vmatprep.subr.bf16.mxu0 0
    %804 = vmatpush1.bf16.msra.mxu0 %v783
    %805 = vmatprep.subr.bf16.mxu0 0
    %806 = vmatpush1.bf16.msra.mxu0 %v784
    %807 = vmatprep.subr.bf16.mxu0 0
    %808 = vmatpush1.bf16.msra.mxu0 %v785
    %809 = vmatprep.subr.bf16.mxu0 0
    %810 = vmatpush1.bf16.msra.mxu0 %v786
    %811 = vmatprep.subr.bf16.mxu0 0
    %812 = vmatpush1.bf16.msra.mxu0 0
    %813 = vmatprep.subr.bf16.mxu0 0
    %814 = vmatpush1.bf16.msra.mxu0 0
    %815 = vmatprep.subr.bf16.mxu0 0
    %816 = vmatpush1.bf16.msra.mxu0 0
    %817 = vmatprep.subr.bf16.mxu0 0
    %818 = vmatpush1.bf16.msra.mxu0 0
    %819 = vmatprep.subr.bf16.mxu0 0
    %820 = vmatpush1.bf16.msra.mxu0 0
    %821 = vmatprep.subr.bf16.mxu0 0
    %822 = vmatpush1.bf16.msra.mxu0 0
    %823 = vmatprep.subr.bf16.mxu0 0
    %824 = vmatpush1.bf16.msra.mxu0 0
    %825 = vmatprep.subr.bf16.mxu0 0
    %826 = vmatpush1.bf16.msra.mxu0 0
    %827 = vmatprep.mubr.bf16.mxu0 0
    %828 = vmatmul.mubr.bf16.gmra.mrb[0].mxu0 %v723
    %v829 = vpop.f32.mrb[0].mxu0
    %v830 = vadd.f32 %v745, %v829
    %v831 = vpop.f32.mrb[0].mxu0
    %v832 = vpop.f32.mrb[0].mxu0
    %v833 = vadd.f32 %v745, %v832
    %v834 = vpop.f32.mrb[0].mxu0
    %835 = vdwg.mxu0
    %v836 = vpack.c.bf16 %v833, %v830
    %v838 = vunpack.c.l.b16 %v836
    %v839 = vunpack.c.h.b16 %v836
    %v840 = vpack.c.b16 %v838, %v838
    %v841 = vpack.c.b16 %v839, %v839
    %844 = vst [vmem:[#allocation14] sm:$0xf] %v840
    %845 = vst [vmem:[#allocation14 + $0x4] sm:$0xf] %v841
    // Predicated region
    $region82: #{tpu_custom_call.1} parent=1 // pred_check
      _
    $region83: #{tpu_custom_call.1} parent=1 // pred_check_branch
      %847 = sbr.rel (0) target = $region85
    $region84: #{tpu_custom_call.1} parent=1 // pred_region
      %s849 = ssub.s32 128, 128
      %850 = vsyncadd [#allocation4], %s849
      %s851 = sshll.u32 [#allocation14], 4
      %s852 = int_to_ptr.vmem [resolvable:$true] %s851
      %857 = dma.vmem_to_hbm [thread:$0]  %s852, 128, %s13, [#allocation4], 64, 64, 4
    $region85: #{tpu_custom_call.1} parent=1 // pred_fallthru
      _
    // Predicated region
    $region86: #{tpu_custom_call.1} parent=1 // pred_check
      _
    $region87: #{tpu_custom_call.1} parent=1 // pred_check_branch
      %859 = sbr.rel (0) target = $region89
    $region88: #{tpu_custom_call.1} parent=1 // pred_region
      %860 = dma.done [#allocation4], 128
    $region89: #{tpu_custom_call.1} parent=1 // pred_fallthru
      _
    %861 = vsyncpa [#allocation3], 1
    %862 = vsyncpa [#allocation6], 1
    %863 = vsyncpa [#allocation9], 1
    %864 = vsyncpa [#allocation12], 1
    %865 = vsyncpa [#allocation4], 1

</llo_original>
